<compile_context>
chip_gen: v5e
topology: v5e:2x2
jax: 0.10.0
libtpu: 0.0.40
codegen_flags: <defaults>
</compile_context>

<pallas_src>
import functools

import jax
import jax.numpy as jnp
from jax.experimental import pallas as pl
from jax.experimental.pallas import tpu as pltpu

raw_text = ('We are about to study the idea of a computational process.\n'
            'Computational processes are abstract beings that inhabit computers.\n'
            'As they evolve, processes manipulate other abstract things called data.\n'
            'The evolution of a process is directed by a pattern of rules\n'
            'called a program. People create programs to direct processes. In effect,\n'
            'we conjure the spirits of the computer with our spells.').split()

vocab = set(raw_text)
vocab_size = len(vocab)

_NEG_BIG = -1e30


def _round_up(n, m):
    return ((n + m - 1) // m) * m


def cbow_kernel(ids_ref, emb_ref, w_ref, b_ref, o_ref, x_ref):
    """Fused CBOW forward for one row-block.

    ids_ref: SMEM (B_pad, C) int32  -- scalar-prefetch token ids
    emb_ref: VMEM (V, E)    f32     -- embedding table (tiny, resident)
    w_ref:   VMEM (Fp, Vp)  bf16    -- padded, transposed linear weight
    b_ref:   VMEM (1, Vp)   f32     -- bias, padded lanes hold -1e30
    o_ref:   VMEM (BM, Vp)  f32     -- log-softmax output block
    x_ref:   VMEM (BM, Fp)  f32     -- scratch: gathered + flattened contexts
    """
    BM = x_ref.shape[0]
    E = emb_ref.shape[1]
    C = ids_ref.shape[1]
    row0 = pl.program_id(0) * BM

    # Zero the scratch so the K-padding columns contribute exactly 0.
    x_ref[...] = jnp.zeros_like(x_ref)

    # In-kernel embedding gather: x[b, c*E:(c+1)*E] = emb[ids[row0 + b, c], :]
    for b in range(BM):                       # static unroll (BM <= 32)
        for c in range(C):
            tok = ids_ref[row0 + b, c]        # scalar read from SMEM
            x_ref[pl.ds(b, 1), pl.ds(c * E, E)] = emb_ref[pl.ds(tok, 1), :]

    # Linear layer on the MXU: bf16 operands, f32 accumulation.
    logits = jnp.dot(x_ref[...].astype(jnp.bfloat16), w_ref[...],
                     preferred_element_type=jnp.float32)
    logits = logits + b_ref[...]              # f32 VPU, broadcast over rows

    # Log-softmax, f32 VPU/EUP path (v5e-safe). Padded lanes are ~-1e30.
    m = jnp.max(logits, axis=-1, keepdims=True)
    shifted = logits - m
    lse = jnp.log(jnp.sum(jnp.exp(shifted), axis=-1, keepdims=True))
    o_ref[...] = (shifted - lse).astype(o_ref.dtype)


def prepare_params(emb_weight, lin_weight, lin_bias):
    """Pre-pack parameters once: bf16 MXU weight, V and F padded to 128."""
    V, E = emb_weight.shape
    F = lin_weight.shape[1]                       # = context_size * embedding_dim
    Vp = _round_up(V, 128)
    Fp = _round_up(F, 128)
    w_t = jnp.asarray(lin_weight, jnp.float32).T                      # (F, V)
    w_pad = jnp.zeros((Fp, Vp), jnp.float32).at[:F, :V].set(w_t)
    w_pad = w_pad.astype(jnp.bfloat16)                                # (Fp, Vp)
    b_pad = jnp.full((1, Vp), _NEG_BIG, jnp.float32)
    b_pad = b_pad.at[0, :V].set(jnp.asarray(lin_bias, jnp.float32))   # (1, Vp)
    emb_f32 = jnp.asarray(emb_weight, jnp.float32)                    # (V, E)
    return emb_f32, w_pad, b_pad


@functools.partial(jax.jit, static_argnames=("V",))
def cbow_forward(inputs, emb_f32, w_pad, b_pad, *, V):
    """inputs: (C,) int32 context ids (module semantics) or (B, C) batched.
    Returns (1, V) / (B, V) f32 log-probabilities.  Whole forward is one jit."""
    ids = jnp.atleast_2d(jnp.asarray(inputs, jnp.int32))              # (B, C)
    B, C = ids.shape
    Fp, Vp = w_pad.shape

    B_pad = _round_up(max(B, 16), 16)      # bf16 packs 16 rows per vreg group
    BM = min(B_pad, 32)                    # rows per grid block (output block)
    B_pad = _round_up(B_pad, BM)
    ids_pad = jnp.zeros((B_pad, C), jnp.int32).at[:B].set(ids)

    cost = pl.CostEstimate(
        flops=2 * B_pad * Fp * Vp,
        transcendentals=B_pad * Vp + B_pad,
        bytes_accessed=(B_pad * C * 4 + emb_f32.size * 4 + Fp * Vp * 2
                        + Vp * 4 + B_pad * Vp * 4),
    )

    out = pl.pallas_call(
        cbow_kernel,
        out_shape=jax.ShapeDtypeStruct((B_pad, Vp), jnp.float32),
        grid_spec=pltpu.PrefetchScalarGridSpec(
            num_scalar_prefetch=1,
            grid=(B_pad // BM,),
            in_specs=[
                pl.BlockSpec(emb_f32.shape, lambda i, _: (0, 0)),
                pl.BlockSpec((Fp, Vp), lambda i, _: (0, 0)),
                pl.BlockSpec((1, Vp), lambda i, _: (0, 0)),
            ],
            out_specs=pl.BlockSpec((BM, Vp), lambda i, _: (i, 0)),
            scratch_shapes=[pltpu.VMEM((BM, Fp), jnp.float32)],
        ),
        compiler_params=pltpu.CompilerParams(
            dimension_semantics=("parallel",)),
        cost_estimate=cost,
    )(ids_pad, emb_f32, w_pad, b_pad)
    return out[:B, :V]


def cbow_reference(inputs, emb_weight, lin_weight, lin_bias):
    """Pure-JAX reference using the same bf16 MXU operands as the kernel."""
    ids = jnp.atleast_2d(jnp.asarray(inputs, jnp.int32))
    x = jnp.take(emb_weight, ids, axis=0).reshape(ids.shape[0], -1)
    logits = jnp.dot(x.astype(jnp.bfloat16),
                     jnp.asarray(lin_weight, jnp.bfloat16).T,
                     preferred_element_type=jnp.float32)
    logits = logits + jnp.asarray(lin_bias, jnp.float32)
    return jax.nn.log_softmax(logits, axis=-1)


if __name__ == "__main__":
    embedding_dim = 16
    context_size = 4
    in_features = embedding_dim * context_size

    word_to_ix = {w: i for i, w in enumerate(sorted(vocab))}

    key = jax.random.PRNGKey(0)
    k_emb, k_w, k_b = jax.random.split(key, 3)

    # nn.Embedding default init: N(0, 1)
    emb_weight = jax.random.normal(k_emb, (vocab_size, embedding_dim), jnp.float32)
    # nn.Linear default init: U(-1/sqrt(in), 1/sqrt(in))
    bound = 1.0 / (in_features ** 0.5)
    lin_weight = jax.random.uniform(k_w, (vocab_size, in_features), jnp.float32,
                                    minval=-bound, maxval=bound)
    lin_bias = jax.random.uniform(k_b, (vocab_size,), jnp.float32,
                                  minval=-bound, maxval=bound)

    emb_f32, w_pad, b_pad = prepare_params(emb_weight, lin_weight, lin_bias)

    # 1) Single context (exact PyTorch module semantics: (C,) -> (1, V)).
    ctx_words = [raw_text[0], raw_text[1], raw_text[3], raw_text[4]]
    single_ids = jnp.asarray([word_to_ix[w] for w in ctx_words], jnp.int32)
    out1 = jax.block_until_ready(
        cbow_forward(single_ids, emb_f32, w_pad, b_pad, V=vocab_size))
    assert out1.shape == (1, vocab_size), out1.shape
    s1 = float(jnp.sum(jnp.exp(out1)))
    assert abs(s1 - 1.0) < 1e-3, s1
    ref1 = cbow_reference(single_ids, emb_weight, lin_weight, lin_bias)
    assert float(jnp.max(jnp.abs(out1 - ref1))) < 2e-2

    # 2) Every CBOW context of the corpus in ONE batched pallas_call.
    contexts = []
    for i in range(2, len(raw_text) - 2):
        ctx = [raw_text[i - 2], raw_text[i - 1], raw_text[i + 1], raw_text[i + 2]]
        contexts.append([word_to_ix[w] for w in ctx])
    batch_ids = jnp.asarray(contexts, jnp.int32)              # (~58, 4)
    out2 = jax.block_until_ready(
        cbow_forward(batch_ids, emb_f32, w_pad, b_pad, V=vocab_size))
    assert out2.shape == (batch_ids.shape[0], vocab_size), out2.shape
    sums = jnp.sum(jnp.exp(out2), axis=-1)
    assert bool(jnp.all(jnp.abs(sums - 1.0) < 1e-3)), sums
    ref2 = cbow_reference(batch_ids, emb_weight, lin_weight, lin_bias)
    assert float(jnp.max(jnp.abs(out2 - ref2))) < 2e-2

    print("KERNEL_OK")
</pallas_src>

<mosaic_0001>
module attributes {stable_mosaic.version = 11 : i64} {
  func.func @cbow_kernel(%arg0: i32, %arg1: memref<16x4xi32, #tpu.memory_space<smem>>, %arg2: memref<49x16xf32, #tpu.memory_space<vmem>>, %arg3: memref<128x128xbf16, #tpu.memory_space<vmem>>, %arg4: memref<1x128xf32, #tpu.memory_space<vmem>>, %arg5: memref<16x128xf32, #tpu.memory_space<vmem>>, %arg6: memref<16x128xf32, #tpu.memory_space<vmem>>) attributes {dimension_semantics = [#tpu.dimension_semantics<parallel>], iteration_bounds = array<i64: 1>, scalar_prefetch = 1 : i64, scratch_operands = 1 : i64, tpu.core_type = #tpu.core_type<tc>, window_params = [{pipeline_mode = #tpu.pipeline_mode<synchronous>, transform_indices = @transform_0, window_bounds = array<i64: 49, 16>}, {pipeline_mode = #tpu.pipeline_mode<synchronous>, transform_indices = @transform_1, window_bounds = array<i64: 128, 128>}, {pipeline_mode = #tpu.pipeline_mode<synchronous>, transform_indices = @transform_2, window_bounds = array<i64: 1, 128>}, {transform_indices = @transform_3, window_bounds = array<i64: 16, 128>}]} {
    %c16_i32 = arith.constant 16 : i32
    %0 = arith.muli %arg0, %c16_i32 : i32
    %cst = arith.constant 0.000000e+00 : f32
    %1 = vector.broadcast %cst : f32 to vector<16x128xf32>
    %c0 = arith.constant 0 : index
    %c0_0 = arith.constant 0 : index
    %2 = vector.load %arg6[%c0, %c0_0] : memref<16x128xf32, #tpu.memory_space<vmem>>, vector<16x128xf32>
    tpu.vector_store %arg6[%c0, %c0_0], %1 {strides = array<i32>} : memref<16x128xf32, #tpu.memory_space<vmem>>, vector<16x128xf32>,
    %c0_i32 = arith.constant 0 : i32
    %3 = arith.addi %0, %c0_i32 : i32
    %4 = arith.index_cast %3 : i32 to index
    %c0_1 = arith.constant 0 : index
    %5 = memref.load %arg1[%4, %c0_1] : memref<16x4xi32, #tpu.memory_space<smem>>
    %6 = arith.index_cast %5 : i32 to index
    %c0_2 = arith.constant 0 : index
    %7 = vector.load %arg2[%6, %c0_2] : memref<49x16xf32, #tpu.memory_space<vmem>>, vector<1x16xf32>
    %c0_3 = arith.constant 0 : index
    %c0_4 = arith.constant 0 : index
    %8 = vector.load %arg6[%c0_3, %c0_4] : memref<16x128xf32, #tpu.memory_space<vmem>>, vector<1x16xf32>
    tpu.vector_store %arg6[%c0_3, %c0_4], %7 {strides = array<i32>} : memref<16x128xf32, #tpu.memory_space<vmem>>, vector<1x16xf32>,
    %c0_i32_5 = arith.constant 0 : i32
    %9 = arith.addi %0, %c0_i32_5 : i32
    %10 = arith.index_cast %9 : i32 to index
    %c1 = arith.constant 1 : index
    %11 = memref.load %arg1[%10, %c1] : memref<16x4xi32, #tpu.memory_space<smem>>
    %12 = arith.index_cast %11 : i32 to index
    %c0_6 = arith.constant 0 : index
    %13 = vector.load %arg2[%12, %c0_6] : memref<49x16xf32, #tpu.memory_space<vmem>>, vector<1x16xf32>
    %c0_7 = arith.constant 0 : index
    %c16 = arith.constant 16 : index
    %14 = vector.load %arg6[%c0_7, %c16] : memref<16x128xf32, #tpu.memory_space<vmem>>, vector<1x16xf32>
    tpu.vector_store %arg6[%c0_7, %c16], %13 {strides = array<i32>} : memref<16x128xf32, #tpu.memory_space<vmem>>, vector<1x16xf32>,
    %c0_i32_8 = arith.constant 0 : i32
    %15 = arith.addi %0, %c0_i32_8 : i32
    %16 = arith.index_cast %15 : i32 to index
    %c2 = arith.constant 2 : index
    %17 = memref.load %arg1[%16, %c2] : memref<16x4xi32, #tpu.memory_space<smem>>
    %18 = arith.index_cast %17 : i32 to index
    %c0_9 = arith.constant 0 : index
    %19 = vector.load %arg2[%18, %c0_9] : memref<49x16xf32, #tpu.memory_space<vmem>>, vector<1x16xf32>
    %c0_10 = arith.constant 0 : index
    %c32 = arith.constant 32 : index
    %20 = vector.load %arg6[%c0_10, %c32] : memref<16x128xf32, #tpu.memory_space<vmem>>, vector<1x16xf32>
    tpu.vector_store %arg6[%c0_10, %c32], %19 {strides = array<i32>} : memref<16x128xf32, #tpu.memory_space<vmem>>, vector<1x16xf32>,
    %c0_i32_11 = arith.constant 0 : i32
    %21 = arith.addi %0, %c0_i32_11 : i32
    %22 = arith.index_cast %21 : i32 to index
    %c3 = arith.constant 3 : index
    %23 = memref.load %arg1[%22, %c3] : memref<16x4xi32, #tpu.memory_space<smem>>
    %24 = arith.index_cast %23 : i32 to index
    %c0_12 = arith.constant 0 : index
    %25 = vector.load %arg2[%24, %c0_12] : memref<49x16xf32, #tpu.memory_space<vmem>>, vector<1x16xf32>
    %c0_13 = arith.constant 0 : index
    %c48 = arith.constant 48 : index
    %26 = vector.load %arg6[%c0_13, %c48] : memref<16x128xf32, #tpu.memory_space<vmem>>, vector<1x16xf32>
    tpu.vector_store %arg6[%c0_13, %c48], %25 {strides = array<i32>} : memref<16x128xf32, #tpu.memory_space<vmem>>, vector<1x16xf32>,
    %c1_i32 = arith.constant 1 : i32
    %27 = arith.addi %0, %c1_i32 : i32
    %28 = arith.index_cast %27 : i32 to index
    %c0_14 = arith.constant 0 : index
    %29 = memref.load %arg1[%28, %c0_14] : memref<16x4xi32, #tpu.memory_space<smem>>
    %30 = arith.index_cast %29 : i32 to index
    %c0_15 = arith.constant 0 : index
    %31 = vector.load %arg2[%30, %c0_15] : memref<49x16xf32, #tpu.memory_space<vmem>>, vector<1x16xf32>
    %c1_16 = arith.constant 1 : index
    %c0_17 = arith.constant 0 : index
    %32 = vector.load %arg6[%c1_16, %c0_17] : memref<16x128xf32, #tpu.memory_space<vmem>>, vector<1x16xf32>
    tpu.vector_store %arg6[%c1_16, %c0_17], %31 {strides = array<i32>} : memref<16x128xf32, #tpu.memory_space<vmem>>, vector<1x16xf32>,
    %c1_i32_18 = arith.constant 1 : i32
    %33 = arith.addi %0, %c1_i32_18 : i32
    %34 = arith.index_cast %33 : i32 to index
    %c1_19 = arith.constant 1 : index
    %35 = memref.load %arg1[%34, %c1_19] : memref<16x4xi32, #tpu.memory_space<smem>>
    %36 = arith.index_cast %35 : i32 to index
    %c0_20 = arith.constant 0 : index
    %37 = vector.load %arg2[%36, %c0_20] : memref<49x16xf32, #tpu.memory_space<vmem>>, vector<1x16xf32>
    %c1_21 = arith.constant 1 : index
    %c16_22 = arith.constant 16 : index
    %38 = vector.load %arg6[%c1_21, %c16_22] : memref<16x128xf32, #tpu.memory_space<vmem>>, vector<1x16xf32>
    tpu.vector_store %arg6[%c1_21, %c16_22], %37 {strides = array<i32>} : memref<16x128xf32, #tpu.memory_space<vmem>>, vector<1x16xf32>,
    %c1_i32_23 = arith.constant 1 : i32
    %39 = arith.addi %0, %c1_i32_23 : i32
    %40 = arith.index_cast %39 : i32 to index
    %c2_24 = arith.constant 2 : index
    %41 = memref.load %arg1[%40, %c2_24] : memref<16x4xi32, #tpu.memory_space<smem>>
    %42 = arith.index_cast %41 : i32 to index
    %c0_25 = arith.constant 0 : index
    %43 = vector.load %arg2[%42, %c0_25] : memref<49x16xf32, #tpu.memory_space<vmem>>, vector<1x16xf32>
    %c1_26 = arith.constant 1 : index
    %c32_27 = arith.constant 32 : index
    %44 = vector.load %arg6[%c1_26, %c32_27] : memref<16x128xf32, #tpu.memory_space<vmem>>, vector<1x16xf32>
    tpu.vector_store %arg6[%c1_26, %c32_27], %43 {strides = array<i32>} : memref<16x128xf32, #tpu.memory_space<vmem>>, vector<1x16xf32>,
    %c1_i32_28 = arith.constant 1 : i32
    %45 = arith.addi %0, %c1_i32_28 : i32
    %46 = arith.index_cast %45 : i32 to index
    %c3_29 = arith.constant 3 : index
    %47 = memref.load %arg1[%46, %c3_29] : memref<16x4xi32, #tpu.memory_space<smem>>
    %48 = arith.index_cast %47 : i32 to index
    %c0_30 = arith.constant 0 : index
    %49 = vector.load %arg2[%48, %c0_30] : memref<49x16xf32, #tpu.memory_space<vmem>>, vector<1x16xf32>
    %c1_31 = arith.constant 1 : index
    %c48_32 = arith.constant 48 : index
    %50 = vector.load %arg6[%c1_31, %c48_32] : memref<16x128xf32, #tpu.memory_space<vmem>>, vector<1x16xf32>
    tpu.vector_store %arg6[%c1_31, %c48_32], %49 {strides = array<i32>} : memref<16x128xf32, #tpu.memory_space<vmem>>, vector<1x16xf32>,
    %c2_i32 = arith.constant 2 : i32
    %51 = arith.addi %0, %c2_i32 : i32
    %52 = arith.index_cast %51 : i32 to index
    %c0_33 = arith.constant 0 : index
    %53 = memref.load %arg1[%52, %c0_33] : memref<16x4xi32, #tpu.memory_space<smem>>
    %54 = arith.index_cast %53 : i32 to index
    %c0_34 = arith.constant 0 : index
    %55 = vector.load %arg2[%54, %c0_34] : memref<49x16xf32, #tpu.memory_space<vmem>>, vector<1x16xf32>
    %c2_35 = arith.constant 2 : index
    %c0_36 = arith.constant 0 : index
    %56 = vector.load %arg6[%c2_35, %c0_36] : memref<16x128xf32, #tpu.memory_space<vmem>>, vector<1x16xf32>
    tpu.vector_store %arg6[%c2_35, %c0_36], %55 {strides = array<i32>} : memref<16x128xf32, #tpu.memory_space<vmem>>, vector<1x16xf32>,
    %c2_i32_37 = arith.constant 2 : i32
    %57 = arith.addi %0, %c2_i32_37 : i32
    %58 = arith.index_cast %57 : i32 to index
    %c1_38 = arith.constant 1 : index
    %59 = memref.load %arg1[%58, %c1_38] : memref<16x4xi32, #tpu.memory_space<smem>>
    %60 = arith.index_cast %59 : i32 to index
    %c0_39 = arith.constant 0 : index
    %61 = vector.load %arg2[%60, %c0_39] : memref<49x16xf32, #tpu.memory_space<vmem>>, vector<1x16xf32>
    %c2_40 = arith.constant 2 : index
    %c16_41 = arith.constant 16 : index
    %62 = vector.load %arg6[%c2_40, %c16_41] : memref<16x128xf32, #tpu.memory_space<vmem>>, vector<1x16xf32>
    tpu.vector_store %arg6[%c2_40, %c16_41], %61 {strides = array<i32>} : memref<16x128xf32, #tpu.memory_space<vmem>>, vector<1x16xf32>,
    %c2_i32_42 = arith.constant 2 : i32
    %63 = arith.addi %0, %c2_i32_42 : i32
    %64 = arith.index_cast %63 : i32 to index
    %c2_43 = arith.constant 2 : index
    %65 = memref.load %arg1[%64, %c2_43] : memref<16x4xi32, #tpu.memory_space<smem>>
    %66 = arith.index_cast %65 : i32 to index
    %c0_44 = arith.constant 0 : index
    %67 = vector.load %arg2[%66, %c0_44] : memref<49x16xf32, #tpu.memory_space<vmem>>, vector<1x16xf32>
    %c2_45 = arith.constant 2 : index
    %c32_46 = arith.constant 32 : index
    %68 = vector.load %arg6[%c2_45, %c32_46] : memref<16x128xf32, #tpu.memory_space<vmem>>, vector<1x16xf32>
    tpu.vector_store %arg6[%c2_45, %c32_46], %67 {strides = array<i32>} : memref<16x128xf32, #tpu.memory_space<vmem>>, vector<1x16xf32>,
    %c2_i32_47 = arith.constant 2 : i32
    %69 = arith.addi %0, %c2_i32_47 : i32
    %70 = arith.index_cast %69 : i32 to index
    %c3_48 = arith.constant 3 : index
    %71 = memref.load %arg1[%70, %c3_48] : memref<16x4xi32, #tpu.memory_space<smem>>
    %72 = arith.index_cast %71 : i32 to index
    %c0_49 = arith.constant 0 : index
    %73 = vector.load %arg2[%72, %c0_49] : memref<49x16xf32, #tpu.memory_space<vmem>>, vector<1x16xf32>
    %c2_50 = arith.constant 2 : index
    %c48_51 = arith.constant 48 : index
    %74 = vector.load %arg6[%c2_50, %c48_51] : memref<16x128xf32, #tpu.memory_space<vmem>>, vector<1x16xf32>
    tpu.vector_store %arg6[%c2_50, %c48_51], %73 {strides = array<i32>} : memref<16x128xf32, #tpu.memory_space<vmem>>, vector<1x16xf32>,
    %c3_i32 = arith.constant 3 : i32
    %75 = arith.addi %0, %c3_i32 : i32
    %76 = arith.index_cast %75 : i32 to index
    %c0_52 = arith.constant 0 : index
    %77 = memref.load %arg1[%76, %c0_52] : memref<16x4xi32, #tpu.memory_space<smem>>
    %78 = arith.index_cast %77 : i32 to index
    %c0_53 = arith.constant 0 : index
    %79 = vector.load %arg2[%78, %c0_53] : memref<49x16xf32, #tpu.memory_space<vmem>>, vector<1x16xf32>
    %c3_54 = arith.constant 3 : index
    %c0_55 = arith.constant 0 : index
    %80 = vector.load %arg6[%c3_54, %c0_55] : memref<16x128xf32, #tpu.memory_space<vmem>>, vector<1x16xf32>
    tpu.vector_store %arg6[%c3_54, %c0_55], %79 {strides = array<i32>} : memref<16x128xf32, #tpu.memory_space<vmem>>, vector<1x16xf32>,
    %c3_i32_56 = arith.constant 3 : i32
    %81 = arith.addi %0, %c3_i32_56 : i32
    %82 = arith.index_cast %81 : i32 to index
    %c1_57 = arith.constant 1 : index
    %83 = memref.load %arg1[%82, %c1_57] : memref<16x4xi32, #tpu.memory_space<smem>>
    %84 = arith.index_cast %83 : i32 to index
    %c0_58 = arith.constant 0 : index
    %85 = vector.load %arg2[%84, %c0_58] : memref<49x16xf32, #tpu.memory_space<vmem>>, vector<1x16xf32>
    %c3_59 = arith.constant 3 : index
    %c16_60 = arith.constant 16 : index
    %86 = vector.load %arg6[%c3_59, %c16_60] : memref<16x128xf32, #tpu.memory_space<vmem>>, vector<1x16xf32>
    tpu.vector_store %arg6[%c3_59, %c16_60], %85 {strides = array<i32>} : memref<16x128xf32, #tpu.memory_space<vmem>>, vector<1x16xf32>,
    %c3_i32_61 = arith.constant 3 : i32
    %87 = arith.addi %0, %c3_i32_61 : i32
    %88 = arith.index_cast %87 : i32 to index
    %c2_62 = arith.constant 2 : index
    %89 = memref.load %arg1[%88, %c2_62] : memref<16x4xi32, #tpu.memory_space<smem>>
    %90 = arith.index_cast %89 : i32 to index
    %c0_63 = arith.constant 0 : index
    %91 = vector.load %arg2[%90, %c0_63] : memref<49x16xf32, #tpu.memory_space<vmem>>, vector<1x16xf32>
    %c3_64 = arith.constant 3 : index
    %c32_65 = arith.constant 32 : index
    %92 = vector.load %arg6[%c3_64, %c32_65] : memref<16x128xf32, #tpu.memory_space<vmem>>, vector<1x16xf32>
    tpu.vector_store %arg6[%c3_64, %c32_65], %91 {strides = array<i32>} : memref<16x128xf32, #tpu.memory_space<vmem>>, vector<1x16xf32>,
    %c3_i32_66 = arith.constant 3 : i32
    %93 = arith.addi %0, %c3_i32_66 : i32
    %94 = arith.index_cast %93 : i32 to index
    %c3_67 = arith.constant 3 : index
    %95 = memref.load %arg1[%94, %c3_67] : memref<16x4xi32, #tpu.memory_space<smem>>
    %96 = arith.index_cast %95 : i32 to index
    %c0_68 = arith.constant 0 : index
    %97 = vector.load %arg2[%96, %c0_68] : memref<49x16xf32, #tpu.memory_space<vmem>>, vector<1x16xf32>
    %c3_69 = arith.constant 3 : index
    %c48_70 = arith.constant 48 : index
    %98 = vector.load %arg6[%c3_69, %c48_70] : memref<16x128xf32, #tpu.memory_space<vmem>>, vector<1x16xf32>
    tpu.vector_store %arg6[%c3_69, %c48_70], %97 {strides = array<i32>} : memref<16x128xf32, #tpu.memory_space<vmem>>, vector<1x16xf32>,
    %c4_i32 = arith.constant 4 : i32
    %99 = arith.addi %0, %c4_i32 : i32
    %100 = arith.index_cast %99 : i32 to index
    %c0_71 = arith.constant 0 : index
    %101 = memref.load %arg1[%100, %c0_71] : memref<16x4xi32, #tpu.memory_space<smem>>
    %102 = arith.index_cast %101 : i32 to index
    %c0_72 = arith.constant 0 : index
    %103 = vector.load %arg2[%102, %c0_72] : memref<49x16xf32, #tpu.memory_space<vmem>>, vector<1x16xf32>
    %c4 = arith.constant 4 : index
    %c0_73 = arith.constant 0 : index
    %104 = vector.load %arg6[%c4, %c0_73] : memref<16x128xf32, #tpu.memory_space<vmem>>, vector<1x16xf32>
    tpu.vector_store %arg6[%c4, %c0_73], %103 {strides = array<i32>} : memref<16x128xf32, #tpu.memory_space<vmem>>, vector<1x16xf32>,
    %c4_i32_74 = arith.constant 4 : i32
    %105 = arith.addi %0, %c4_i32_74 : i32
    %106 = arith.index_cast %105 : i32 to index
    %c1_75 = arith.constant 1 : index
    %107 = memref.load %arg1[%106, %c1_75] : memref<16x4xi32, #tpu.memory_space<smem>>
    %108 = arith.index_cast %107 : i32 to index
    %c0_76 = arith.constant 0 : index
    %109 = vector.load %arg2[%108, %c0_76] : memref<49x16xf32, #tpu.memory_space<vmem>>, vector<1x16xf32>
    %c4_77 = arith.constant 4 : index
    %c16_78 = arith.constant 16 : index
    %110 = vector.load %arg6[%c4_77, %c16_78] : memref<16x128xf32, #tpu.memory_space<vmem>>, vector<1x16xf32>
    tpu.vector_store %arg6[%c4_77, %c16_78], %109 {strides = array<i32>} : memref<16x128xf32, #tpu.memory_space<vmem>>, vector<1x16xf32>,
    %c4_i32_79 = arith.constant 4 : i32
    %111 = arith.addi %0, %c4_i32_79 : i32
    %112 = arith.index_cast %111 : i32 to index
    %c2_80 = arith.constant 2 : index
    %113 = memref.load %arg1[%112, %c2_80] : memref<16x4xi32, #tpu.memory_space<smem>>
    %114 = arith.index_cast %113 : i32 to index
    %c0_81 = arith.constant 0 : index
    %115 = vector.load %arg2[%114, %c0_81] : memref<49x16xf32, #tpu.memory_space<vmem>>, vector<1x16xf32>
    %c4_82 = arith.constant 4 : index
    %c32_83 = arith.constant 32 : index
    %116 = vector.load %arg6[%c4_82, %c32_83] : memref<16x128xf32, #tpu.memory_space<vmem>>, vector<1x16xf32>
    tpu.vector_store %arg6[%c4_82, %c32_83], %115 {strides = array<i32>} : memref<16x128xf32, #tpu.memory_space<vmem>>, vector<1x16xf32>,
    %c4_i32_84 = arith.constant 4 : i32
    %117 = arith.addi %0, %c4_i32_84 : i32
    %118 = arith.index_cast %117 : i32 to index
    %c3_85 = arith.constant 3 : index
    %119 = memref.load %arg1[%118, %c3_85] : memref<16x4xi32, #tpu.memory_space<smem>>
    %120 = arith.index_cast %119 : i32 to index
    %c0_86 = arith.constant 0 : index
    %121 = vector.load %arg2[%120, %c0_86] : memref<49x16xf32, #tpu.memory_space<vmem>>, vector<1x16xf32>
    %c4_87 = arith.constant 4 : index
    %c48_88 = arith.constant 48 : index
    %122 = vector.load %arg6[%c4_87, %c48_88] : memref<16x128xf32, #tpu.memory_space<vmem>>, vector<1x16xf32>
    tpu.vector_store %arg6[%c4_87, %c48_88], %121 {strides = array<i32>} : memref<16x128xf32, #tpu.memory_space<vmem>>, vector<1x16xf32>,
    %c5_i32 = arith.constant 5 : i32
    %123 = arith.addi %0, %c5_i32 : i32
    %124 = arith.index_cast %123 : i32 to index
    %c0_89 = arith.constant 0 : index
    %125 = memref.load %arg1[%124, %c0_89] : memref<16x4xi32, #tpu.memory_space<smem>>
    %126 = arith.index_cast %125 : i32 to index
    %c0_90 = arith.constant 0 : index
    %127 = vector.load %arg2[%126, %c0_90] : memref<49x16xf32, #tpu.memory_space<vmem>>, vector<1x16xf32>
    %c5 = arith.constant 5 : index
    %c0_91 = arith.constant 0 : index
    %128 = vector.load %arg6[%c5, %c0_91] : memref<16x128xf32, #tpu.memory_space<vmem>>, vector<1x16xf32>
    tpu.vector_store %arg6[%c5, %c0_91], %127 {strides = array<i32>} : memref<16x128xf32, #tpu.memory_space<vmem>>, vector<1x16xf32>,
    %c5_i32_92 = arith.constant 5 : i32
    %129 = arith.addi %0, %c5_i32_92 : i32
    %130 = arith.index_cast %129 : i32 to index
    %c1_93 = arith.constant 1 : index
    %131 = memref.load %arg1[%130, %c1_93] : memref<16x4xi32, #tpu.memory_space<smem>>
    %132 = arith.index_cast %131 : i32 to index
    %c0_94 = arith.constant 0 : index
    %133 = vector.load %arg2[%132, %c0_94] : memref<49x16xf32, #tpu.memory_space<vmem>>, vector<1x16xf32>
    %c5_95 = arith.constant 5 : index
    %c16_96 = arith.constant 16 : index
    %134 = vector.load %arg6[%c5_95, %c16_96] : memref<16x128xf32, #tpu.memory_space<vmem>>, vector<1x16xf32>
    tpu.vector_store %arg6[%c5_95, %c16_96], %133 {strides = array<i32>} : memref<16x128xf32, #tpu.memory_space<vmem>>, vector<1x16xf32>,
    %c5_i32_97 = arith.constant 5 : i32
    %135 = arith.addi %0, %c5_i32_97 : i32
    %136 = arith.index_cast %135 : i32 to index
    %c2_98 = arith.constant 2 : index
    %137 = memref.load %arg1[%136, %c2_98] : memref<16x4xi32, #tpu.memory_space<smem>>
    %138 = arith.index_cast %137 : i32 to index
    %c0_99 = arith.constant 0 : index
    %139 = vector.load %arg2[%138, %c0_99] : memref<49x16xf32, #tpu.memory_space<vmem>>, vector<1x16xf32>
    %c5_100 = arith.constant 5 : index
    %c32_101 = arith.constant 32 : index
    %140 = vector.load %arg6[%c5_100, %c32_101] : memref<16x128xf32, #tpu.memory_space<vmem>>, vector<1x16xf32>
    tpu.vector_store %arg6[%c5_100, %c32_101], %139 {strides = array<i32>} : memref<16x128xf32, #tpu.memory_space<vmem>>, vector<1x16xf32>,
    %c5_i32_102 = arith.constant 5 : i32
    %141 = arith.addi %0, %c5_i32_102 : i32
    %142 = arith.index_cast %141 : i32 to index
    %c3_103 = arith.constant 3 : index
    %143 = memref.load %arg1[%142, %c3_103] : memref<16x4xi32, #tpu.memory_space<smem>>
    %144 = arith.index_cast %143 : i32 to index
    %c0_104 = arith.constant 0 : index
    %145 = vector.load %arg2[%144, %c0_104] : memref<49x16xf32, #tpu.memory_space<vmem>>, vector<1x16xf32>
    %c5_105 = arith.constant 5 : index
    %c48_106 = arith.constant 48 : index
    %146 = vector.load %arg6[%c5_105, %c48_106] : memref<16x128xf32, #tpu.memory_space<vmem>>, vector<1x16xf32>
    tpu.vector_store %arg6[%c5_105, %c48_106], %145 {strides = array<i32>} : memref<16x128xf32, #tpu.memory_space<vmem>>, vector<1x16xf32>,
    %c6_i32 = arith.constant 6 : i32
    %147 = arith.addi %0, %c6_i32 : i32
    %148 = arith.index_cast %147 : i32 to index
    %c0_107 = arith.constant 0 : index
    %149 = memref.load %arg1[%148, %c0_107] : memref<16x4xi32, #tpu.memory_space<smem>>
    %150 = arith.index_cast %149 : i32 to index
    %c0_108 = arith.constant 0 : index
    %151 = vector.load %arg2[%150, %c0_108] : memref<49x16xf32, #tpu.memory_space<vmem>>, vector<1x16xf32>
    %c6 = arith.constant 6 : index
    %c0_109 = arith.constant 0 : index
    %152 = vector.load %arg6[%c6, %c0_109] : memref<16x128xf32, #tpu.memory_space<vmem>>, vector<1x16xf32>
    tpu.vector_store %arg6[%c6, %c0_109], %151 {strides = array<i32>} : memref<16x128xf32, #tpu.memory_space<vmem>>, vector<1x16xf32>,
    %c6_i32_110 = arith.constant 6 : i32
    %153 = arith.addi %0, %c6_i32_110 : i32
    %154 = arith.index_cast %153 : i32 to index
    %c1_111 = arith.constant 1 : index
    %155 = memref.load %arg1[%154, %c1_111] : memref<16x4xi32, #tpu.memory_space<smem>>
    %156 = arith.index_cast %155 : i32 to index
    %c0_112 = arith.constant 0 : index
    %157 = vector.load %arg2[%156, %c0_112] : memref<49x16xf32, #tpu.memory_space<vmem>>, vector<1x16xf32>
    %c6_113 = arith.constant 6 : index
    %c16_114 = arith.constant 16 : index
    %158 = vector.load %arg6[%c6_113, %c16_114] : memref<16x128xf32, #tpu.memory_space<vmem>>, vector<1x16xf32>
    tpu.vector_store %arg6[%c6_113, %c16_114], %157 {strides = array<i32>} : memref<16x128xf32, #tpu.memory_space<vmem>>, vector<1x16xf32>,
    %c6_i32_115 = arith.constant 6 : i32
    %159 = arith.addi %0, %c6_i32_115 : i32
    %160 = arith.index_cast %159 : i32 to index
    %c2_116 = arith.constant 2 : index
    %161 = memref.load %arg1[%160, %c2_116] : memref<16x4xi32, #tpu.memory_space<smem>>
    %162 = arith.index_cast %161 : i32 to index
    %c0_117 = arith.constant 0 : index
    %163 = vector.load %arg2[%162, %c0_117] : memref<49x16xf32, #tpu.memory_space<vmem>>, vector<1x16xf32>
    %c6_118 = arith.constant 6 : index
    %c32_119 = arith.constant 32 : index
    %164 = vector.load %arg6[%c6_118, %c32_119] : memref<16x128xf32, #tpu.memory_space<vmem>>, vector<1x16xf32>
    tpu.vector_store %arg6[%c6_118, %c32_119], %163 {strides = array<i32>} : memref<16x128xf32, #tpu.memory_space<vmem>>, vector<1x16xf32>,
    %c6_i32_120 = arith.constant 6 : i32
    %165 = arith.addi %0, %c6_i32_120 : i32
    %166 = arith.index_cast %165 : i32 to index
    %c3_121 = arith.constant 3 : index
    %167 = memref.load %arg1[%166, %c3_121] : memref<16x4xi32, #tpu.memory_space<smem>>
    %168 = arith.index_cast %167 : i32 to index
    %c0_122 = arith.constant 0 : index
    %169 = vector.load %arg2[%168, %c0_122] : memref<49x16xf32, #tpu.memory_space<vmem>>, vector<1x16xf32>
    %c6_123 = arith.constant 6 : index
    %c48_124 = arith.constant 48 : index
    %170 = vector.load %arg6[%c6_123, %c48_124] : memref<16x128xf32, #tpu.memory_space<vmem>>, vector<1x16xf32>
    tpu.vector_store %arg6[%c6_123, %c48_124], %169 {strides = array<i32>} : memref<16x128xf32, #tpu.memory_space<vmem>>, vector<1x16xf32>,
    %c7_i32 = arith.constant 7 : i32
    %171 = arith.addi %0, %c7_i32 : i32
    %172 = arith.index_cast %171 : i32 to index
    %c0_125 = arith.constant 0 : index
    %173 = memref.load %arg1[%172, %c0_125] : memref<16x4xi32, #tpu.memory_space<smem>>
    %174 = arith.index_cast %173 : i32 to index
    %c0_126 = arith.constant 0 : index
    %175 = vector.load %arg2[%174, %c0_126] : memref<49x16xf32, #tpu.memory_space<vmem>>, vector<1x16xf32>
    %c7 = arith.constant 7 : index
    %c0_127 = arith.constant 0 : index
    %176 = vector.load %arg6[%c7, %c0_127] : memref<16x128xf32, #tpu.memory_space<vmem>>, vector<1x16xf32>
    tpu.vector_store %arg6[%c7, %c0_127], %175 {strides = array<i32>} : memref<16x128xf32, #tpu.memory_space<vmem>>, vector<1x16xf32>,
    %c7_i32_128 = arith.constant 7 : i32
    %177 = arith.addi %0, %c7_i32_128 : i32
    %178 = arith.index_cast %177 : i32 to index
    %c1_129 = arith.constant 1 : index
    %179 = memref.load %arg1[%178, %c1_129] : memref<16x4xi32, #tpu.memory_space<smem>>
    %180 = arith.index_cast %179 : i32 to index
    %c0_130 = arith.constant 0 : index
    %181 = vector.load %arg2[%180, %c0_130] : memref<49x16xf32, #tpu.memory_space<vmem>>, vector<1x16xf32>
    %c7_131 = arith.constant 7 : index
    %c16_132 = arith.constant 16 : index
    %182 = vector.load %arg6[%c7_131, %c16_132] : memref<16x128xf32, #tpu.memory_space<vmem>>, vector<1x16xf32>
    tpu.vector_store %arg6[%c7_131, %c16_132], %181 {strides = array<i32>} : memref<16x128xf32, #tpu.memory_space<vmem>>, vector<1x16xf32>,
    %c7_i32_133 = arith.constant 7 : i32
    %183 = arith.addi %0, %c7_i32_133 : i32
    %184 = arith.index_cast %183 : i32 to index
    %c2_134 = arith.constant 2 : index
    %185 = memref.load %arg1[%184, %c2_134] : memref<16x4xi32, #tpu.memory_space<smem>>
    %186 = arith.index_cast %185 : i32 to index
    %c0_135 = arith.constant 0 : index
    %187 = vector.load %arg2[%186, %c0_135] : memref<49x16xf32, #tpu.memory_space<vmem>>, vector<1x16xf32>
    %c7_136 = arith.constant 7 : index
    %c32_137 = arith.constant 32 : index
    %188 = vector.load %arg6[%c7_136, %c32_137] : memref<16x128xf32, #tpu.memory_space<vmem>>, vector<1x16xf32>
    tpu.vector_store %arg6[%c7_136, %c32_137], %187 {strides = array<i32>} : memref<16x128xf32, #tpu.memory_space<vmem>>, vector<1x16xf32>,
    %c7_i32_138 = arith.constant 7 : i32
    %189 = arith.addi %0, %c7_i32_138 : i32
    %190 = arith.index_cast %189 : i32 to index
    %c3_139 = arith.constant 3 : index
    %191 = memref.load %arg1[%190, %c3_139] : memref<16x4xi32, #tpu.memory_space<smem>>
    %192 = arith.index_cast %191 : i32 to index
    %c0_140 = arith.constant 0 : index
    %193 = vector.load %arg2[%192, %c0_140] : memref<49x16xf32, #tpu.memory_space<vmem>>, vector<1x16xf32>
    %c7_141 = arith.constant 7 : index
    %c48_142 = arith.constant 48 : index
    %194 = vector.load %arg6[%c7_141, %c48_142] : memref<16x128xf32, #tpu.memory_space<vmem>>, vector<1x16xf32>
    tpu.vector_store %arg6[%c7_141, %c48_142], %193 {strides = array<i32>} : memref<16x128xf32, #tpu.memory_space<vmem>>, vector<1x16xf32>,
    %c8_i32 = arith.constant 8 : i32
    %195 = arith.addi %0, %c8_i32 : i32
    %196 = arith.index_cast %195 : i32 to index
    %c0_143 = arith.constant 0 : index
    %197 = memref.load %arg1[%196, %c0_143] : memref<16x4xi32, #tpu.memory_space<smem>>
    %198 = arith.index_cast %197 : i32 to index
    %c0_144 = arith.constant 0 : index
    %199 = vector.load %arg2[%198, %c0_144] : memref<49x16xf32, #tpu.memory_space<vmem>>, vector<1x16xf32>
    %c8 = arith.constant 8 : index
    %c0_145 = arith.constant 0 : index
    %200 = vector.load %arg6[%c8, %c0_145] : memref<16x128xf32, #tpu.memory_space<vmem>>, vector<1x16xf32>
    tpu.vector_store %arg6[%c8, %c0_145], %199 {strides = array<i32>} : memref<16x128xf32, #tpu.memory_space<vmem>>, vector<1x16xf32>,
    %c8_i32_146 = arith.constant 8 : i32
    %201 = arith.addi %0, %c8_i32_146 : i32
    %202 = arith.index_cast %201 : i32 to index
    %c1_147 = arith.constant 1 : index
    %203 = memref.load %arg1[%202, %c1_147] : memref<16x4xi32, #tpu.memory_space<smem>>
    %204 = arith.index_cast %203 : i32 to index
    %c0_148 = arith.constant 0 : index
    %205 = vector.load %arg2[%204, %c0_148] : memref<49x16xf32, #tpu.memory_space<vmem>>, vector<1x16xf32>
    %c8_149 = arith.constant 8 : index
    %c16_150 = arith.constant 16 : index
    %206 = vector.load %arg6[%c8_149, %c16_150] : memref<16x128xf32, #tpu.memory_space<vmem>>, vector<1x16xf32>
    tpu.vector_store %arg6[%c8_149, %c16_150], %205 {strides = array<i32>} : memref<16x128xf32, #tpu.memory_space<vmem>>, vector<1x16xf32>,
    %c8_i32_151 = arith.constant 8 : i32
    %207 = arith.addi %0, %c8_i32_151 : i32
    %208 = arith.index_cast %207 : i32 to index
    %c2_152 = arith.constant 2 : index
    %209 = memref.load %arg1[%208, %c2_152] : memref<16x4xi32, #tpu.memory_space<smem>>
    %210 = arith.index_cast %209 : i32 to index
    %c0_153 = arith.constant 0 : index
    %211 = vector.load %arg2[%210, %c0_153] : memref<49x16xf32, #tpu.memory_space<vmem>>, vector<1x16xf32>
    %c8_154 = arith.constant 8 : index
    %c32_155 = arith.constant 32 : index
    %212 = vector.load %arg6[%c8_154, %c32_155] : memref<16x128xf32, #tpu.memory_space<vmem>>, vector<1x16xf32>
    tpu.vector_store %arg6[%c8_154, %c32_155], %211 {strides = array<i32>} : memref<16x128xf32, #tpu.memory_space<vmem>>, vector<1x16xf32>,
    %c8_i32_156 = arith.constant 8 : i32
    %213 = arith.addi %0, %c8_i32_156 : i32
    %214 = arith.index_cast %213 : i32 to index
    %c3_157 = arith.constant 3 : index
    %215 = memref.load %arg1[%214, %c3_157] : memref<16x4xi32, #tpu.memory_space<smem>>
    %216 = arith.index_cast %215 : i32 to index
    %c0_158 = arith.constant 0 : index
    %217 = vector.load %arg2[%216, %c0_158] : memref<49x16xf32, #tpu.memory_space<vmem>>, vector<1x16xf32>
    %c8_159 = arith.constant 8 : index
    %c48_160 = arith.constant 48 : index
    %218 = vector.load %arg6[%c8_159, %c48_160] : memref<16x128xf32, #tpu.memory_space<vmem>>, vector<1x16xf32>
    tpu.vector_store %arg6[%c8_159, %c48_160], %217 {strides = array<i32>} : memref<16x128xf32, #tpu.memory_space<vmem>>, vector<1x16xf32>,
    %c9_i32 = arith.constant 9 : i32
    %219 = arith.addi %0, %c9_i32 : i32
    %220 = arith.index_cast %219 : i32 to index
    %c0_161 = arith.constant 0 : index
    %221 = memref.load %arg1[%220, %c0_161] : memref<16x4xi32, #tpu.memory_space<smem>>
    %222 = arith.index_cast %221 : i32 to index
    %c0_162 = arith.constant 0 : index
    %223 = vector.load %arg2[%222, %c0_162] : memref<49x16xf32, #tpu.memory_space<vmem>>, vector<1x16xf32>
    %c9 = arith.constant 9 : index
    %c0_163 = arith.constant 0 : index
    %224 = vector.load %arg6[%c9, %c0_163] : memref<16x128xf32, #tpu.memory_space<vmem>>, vector<1x16xf32>
    tpu.vector_store %arg6[%c9, %c0_163], %223 {strides = array<i32>} : memref<16x128xf32, #tpu.memory_space<vmem>>, vector<1x16xf32>,
    %c9_i32_164 = arith.constant 9 : i32
    %225 = arith.addi %0, %c9_i32_164 : i32
    %226 = arith.index_cast %225 : i32 to index
    %c1_165 = arith.constant 1 : index
    %227 = memref.load %arg1[%226, %c1_165] : memref<16x4xi32, #tpu.memory_space<smem>>
    %228 = arith.index_cast %227 : i32 to index
    %c0_166 = arith.constant 0 : index
    %229 = vector.load %arg2[%228, %c0_166] : memref<49x16xf32, #tpu.memory_space<vmem>>, vector<1x16xf32>
    %c9_167 = arith.constant 9 : index
    %c16_168 = arith.constant 16 : index
    %230 = vector.load %arg6[%c9_167, %c16_168] : memref<16x128xf32, #tpu.memory_space<vmem>>, vector<1x16xf32>
    tpu.vector_store %arg6[%c9_167, %c16_168], %229 {strides = array<i32>} : memref<16x128xf32, #tpu.memory_space<vmem>>, vector<1x16xf32>,
    %c9_i32_169 = arith.constant 9 : i32
    %231 = arith.addi %0, %c9_i32_169 : i32
    %232 = arith.index_cast %231 : i32 to index
    %c2_170 = arith.constant 2 : index
    %233 = memref.load %arg1[%232, %c2_170] : memref<16x4xi32, #tpu.memory_space<smem>>
    %234 = arith.index_cast %233 : i32 to index
    %c0_171 = arith.constant 0 : index
    %235 = vector.load %arg2[%234, %c0_171] : memref<49x16xf32, #tpu.memory_space<vmem>>, vector<1x16xf32>
    %c9_172 = arith.constant 9 : index
    %c32_173 = arith.constant 32 : index
    %236 = vector.load %arg6[%c9_172, %c32_173] : memref<16x128xf32, #tpu.memory_space<vmem>>, vector<1x16xf32>
    tpu.vector_store %arg6[%c9_172, %c32_173], %235 {strides = array<i32>} : memref<16x128xf32, #tpu.memory_space<vmem>>, vector<1x16xf32>,
    %c9_i32_174 = arith.constant 9 : i32
    %237 = arith.addi %0, %c9_i32_174 : i32
    %238 = arith.index_cast %237 : i32 to index
    %c3_175 = arith.constant 3 : index
    %239 = memref.load %arg1[%238, %c3_175] : memref<16x4xi32, #tpu.memory_space<smem>>
    %240 = arith.index_cast %239 : i32 to index
    %c0_176 = arith.constant 0 : index
    %241 = vector.load %arg2[%240, %c0_176] : memref<49x16xf32, #tpu.memory_space<vmem>>, vector<1x16xf32>
    %c9_177 = arith.constant 9 : index
    %c48_178 = arith.constant 48 : index
    %242 = vector.load %arg6[%c9_177, %c48_178] : memref<16x128xf32, #tpu.memory_space<vmem>>, vector<1x16xf32>
    tpu.vector_store %arg6[%c9_177, %c48_178], %241 {strides = array<i32>} : memref<16x128xf32, #tpu.memory_space<vmem>>, vector<1x16xf32>,
    %c10_i32 = arith.constant 10 : i32
    %243 = arith.addi %0, %c10_i32 : i32
    %244 = arith.index_cast %243 : i32 to index
    %c0_179 = arith.constant 0 : index
    %245 = memref.load %arg1[%244, %c0_179] : memref<16x4xi32, #tpu.memory_space<smem>>
    %246 = arith.index_cast %245 : i32 to index
    %c0_180 = arith.constant 0 : index
    %247 = vector.load %arg2[%246, %c0_180] : memref<49x16xf32, #tpu.memory_space<vmem>>, vector<1x16xf32>
    %c10 = arith.constant 10 : index
    %c0_181 = arith.constant 0 : index
    %248 = vector.load %arg6[%c10, %c0_181] : memref<16x128xf32, #tpu.memory_space<vmem>>, vector<1x16xf32>
    tpu.vector_store %arg6[%c10, %c0_181], %247 {strides = array<i32>} : memref<16x128xf32, #tpu.memory_space<vmem>>, vector<1x16xf32>,
    %c10_i32_182 = arith.constant 10 : i32
    %249 = arith.addi %0, %c10_i32_182 : i32
    %250 = arith.index_cast %249 : i32 to index
    %c1_183 = arith.constant 1 : index
    %251 = memref.load %arg1[%250, %c1_183] : memref<16x4xi32, #tpu.memory_space<smem>>
    %252 = arith.index_cast %251 : i32 to index
    %c0_184 = arith.constant 0 : index
    %253 = vector.load %arg2[%252, %c0_184] : memref<49x16xf32, #tpu.memory_space<vmem>>, vector<1x16xf32>
    %c10_185 = arith.constant 10 : index
    %c16_186 = arith.constant 16 : index
    %254 = vector.load %arg6[%c10_185, %c16_186] : memref<16x128xf32, #tpu.memory_space<vmem>>, vector<1x16xf32>
    tpu.vector_store %arg6[%c10_185, %c16_186], %253 {strides = array<i32>} : memref<16x128xf32, #tpu.memory_space<vmem>>, vector<1x16xf32>,
    %c10_i32_187 = arith.constant 10 : i32
    %255 = arith.addi %0, %c10_i32_187 : i32
    %256 = arith.index_cast %255 : i32 to index
    %c2_188 = arith.constant 2 : index
    %257 = memref.load %arg1[%256, %c2_188] : memref<16x4xi32, #tpu.memory_space<smem>>
    %258 = arith.index_cast %257 : i32 to index
    %c0_189 = arith.constant 0 : index
    %259 = vector.load %arg2[%258, %c0_189] : memref<49x16xf32, #tpu.memory_space<vmem>>, vector<1x16xf32>
    %c10_190 = arith.constant 10 : index
    %c32_191 = arith.constant 32 : index
    %260 = vector.load %arg6[%c10_190, %c32_191] : memref<16x128xf32, #tpu.memory_space<vmem>>, vector<1x16xf32>
    tpu.vector_store %arg6[%c10_190, %c32_191], %259 {strides = array<i32>} : memref<16x128xf32, #tpu.memory_space<vmem>>, vector<1x16xf32>,
    %c10_i32_192 = arith.constant 10 : i32
    %261 = arith.addi %0, %c10_i32_192 : i32
    %262 = arith.index_cast %261 : i32 to index
    %c3_193 = arith.constant 3 : index
    %263 = memref.load %arg1[%262, %c3_193] : memref<16x4xi32, #tpu.memory_space<smem>>
    %264 = arith.index_cast %263 : i32 to index
    %c0_194 = arith.constant 0 : index
    %265 = vector.load %arg2[%264, %c0_194] : memref<49x16xf32, #tpu.memory_space<vmem>>, vector<1x16xf32>
    %c10_195 = arith.constant 10 : index
    %c48_196 = arith.constant 48 : index
    %266 = vector.load %arg6[%c10_195, %c48_196] : memref<16x128xf32, #tpu.memory_space<vmem>>, vector<1x16xf32>
    tpu.vector_store %arg6[%c10_195, %c48_196], %265 {strides = array<i32>} : memref<16x128xf32, #tpu.memory_space<vmem>>, vector<1x16xf32>,
    %c11_i32 = arith.constant 11 : i32
    %267 = arith.addi %0, %c11_i32 : i32
    %268 = arith.index_cast %267 : i32 to index
    %c0_197 = arith.constant 0 : index
    %269 = memref.load %arg1[%268, %c0_197] : memref<16x4xi32, #tpu.memory_space<smem>>
    %270 = arith.index_cast %269 : i32 to index
    %c0_198 = arith.constant 0 : index
    %271 = vector.load %arg2[%270, %c0_198] : memref<49x16xf32, #tpu.memory_space<vmem>>, vector<1x16xf32>
    %c11 = arith.constant 11 : index
    %c0_199 = arith.constant 0 : index
    %272 = vector.load %arg6[%c11, %c0_199] : memref<16x128xf32, #tpu.memory_space<vmem>>, vector<1x16xf32>
    tpu.vector_store %arg6[%c11, %c0_199], %271 {strides = array<i32>} : memref<16x128xf32, #tpu.memory_space<vmem>>, vector<1x16xf32>,
    %c11_i32_200 = arith.constant 11 : i32
    %273 = arith.addi %0, %c11_i32_200 : i32
    %274 = arith.index_cast %273 : i32 to index
    %c1_201 = arith.constant 1 : index
    %275 = memref.load %arg1[%274, %c1_201] : memref<16x4xi32, #tpu.memory_space<smem>>
    %276 = arith.index_cast %275 : i32 to index
    %c0_202 = arith.constant 0 : index
    %277 = vector.load %arg2[%276, %c0_202] : memref<49x16xf32, #tpu.memory_space<vmem>>, vector<1x16xf32>
    %c11_203 = arith.constant 11 : index
    %c16_204 = arith.constant 16 : index
    %278 = vector.load %arg6[%c11_203, %c16_204] : memref<16x128xf32, #tpu.memory_space<vmem>>, vector<1x16xf32>
    tpu.vector_store %arg6[%c11_203, %c16_204], %277 {strides = array<i32>} : memref<16x128xf32, #tpu.memory_space<vmem>>, vector<1x16xf32>,
    %c11_i32_205 = arith.constant 11 : i32
    %279 = arith.addi %0, %c11_i32_205 : i32
    %280 = arith.index_cast %279 : i32 to index
    %c2_206 = arith.constant 2 : index
    %281 = memref.load %arg1[%280, %c2_206] : memref<16x4xi32, #tpu.memory_space<smem>>
    %282 = arith.index_cast %281 : i32 to index
    %c0_207 = arith.constant 0 : index
    %283 = vector.load %arg2[%282, %c0_207] : memref<49x16xf32, #tpu.memory_space<vmem>>, vector<1x16xf32>
    %c11_208 = arith.constant 11 : index
    %c32_209 = arith.constant 32 : index
    %284 = vector.load %arg6[%c11_208, %c32_209] : memref<16x128xf32, #tpu.memory_space<vmem>>, vector<1x16xf32>
    tpu.vector_store %arg6[%c11_208, %c32_209], %283 {strides = array<i32>} : memref<16x128xf32, #tpu.memory_space<vmem>>, vector<1x16xf32>,
    %c11_i32_210 = arith.constant 11 : i32
    %285 = arith.addi %0, %c11_i32_210 : i32
    %286 = arith.index_cast %285 : i32 to index
    %c3_211 = arith.constant 3 : index
    %287 = memref.load %arg1[%286, %c3_211] : memref<16x4xi32, #tpu.memory_space<smem>>
    %288 = arith.index_cast %287 : i32 to index
    %c0_212 = arith.constant 0 : index
    %289 = vector.load %arg2[%288, %c0_212] : memref<49x16xf32, #tpu.memory_space<vmem>>, vector<1x16xf32>
    %c11_213 = arith.constant 11 : index
    %c48_214 = arith.constant 48 : index
    %290 = vector.load %arg6[%c11_213, %c48_214] : memref<16x128xf32, #tpu.memory_space<vmem>>, vector<1x16xf32>
    tpu.vector_store %arg6[%c11_213, %c48_214], %289 {strides = array<i32>} : memref<16x128xf32, #tpu.memory_space<vmem>>, vector<1x16xf32>,
    %c12_i32 = arith.constant 12 : i32
    %291 = arith.addi %0, %c12_i32 : i32
    %292 = arith.index_cast %291 : i32 to index
    %c0_215 = arith.constant 0 : index
    %293 = memref.load %arg1[%292, %c0_215] : memref<16x4xi32, #tpu.memory_space<smem>>
    %294 = arith.index_cast %293 : i32 to index
    %c0_216 = arith.constant 0 : index
    %295 = vector.load %arg2[%294, %c0_216] : memref<49x16xf32, #tpu.memory_space<vmem>>, vector<1x16xf32>
    %c12 = arith.constant 12 : index
    %c0_217 = arith.constant 0 : index
    %296 = vector.load %arg6[%c12, %c0_217] : memref<16x128xf32, #tpu.memory_space<vmem>>, vector<1x16xf32>
    tpu.vector_store %arg6[%c12, %c0_217], %295 {strides = array<i32>} : memref<16x128xf32, #tpu.memory_space<vmem>>, vector<1x16xf32>,
    %c12_i32_218 = arith.constant 12 : i32
    %297 = arith.addi %0, %c12_i32_218 : i32
    %298 = arith.index_cast %297 : i32 to index
    %c1_219 = arith.constant 1 : index
    %299 = memref.load %arg1[%298, %c1_219] : memref<16x4xi32, #tpu.memory_space<smem>>
    %300 = arith.index_cast %299 : i32 to index
    %c0_220 = arith.constant 0 : index
    %301 = vector.load %arg2[%300, %c0_220] : memref<49x16xf32, #tpu.memory_space<vmem>>, vector<1x16xf32>
    %c12_221 = arith.constant 12 : index
    %c16_222 = arith.constant 16 : index
    %302 = vector.load %arg6[%c12_221, %c16_222] : memref<16x128xf32, #tpu.memory_space<vmem>>, vector<1x16xf32>
    tpu.vector_store %arg6[%c12_221, %c16_222], %301 {strides = array<i32>} : memref<16x128xf32, #tpu.memory_space<vmem>>, vector<1x16xf32>,
    %c12_i32_223 = arith.constant 12 : i32
    %303 = arith.addi %0, %c12_i32_223 : i32
    %304 = arith.index_cast %303 : i32 to index
    %c2_224 = arith.constant 2 : index
    %305 = memref.load %arg1[%304, %c2_224] : memref<16x4xi32, #tpu.memory_space<smem>>
    %306 = arith.index_cast %305 : i32 to index
    %c0_225 = arith.constant 0 : index
    %307 = vector.load %arg2[%306, %c0_225] : memref<49x16xf32, #tpu.memory_space<vmem>>, vector<1x16xf32>
    %c12_226 = arith.constant 12 : index
    %c32_227 = arith.constant 32 : index
    %308 = vector.load %arg6[%c12_226, %c32_227] : memref<16x128xf32, #tpu.memory_space<vmem>>, vector<1x16xf32>
    tpu.vector_store %arg6[%c12_226, %c32_227], %307 {strides = array<i32>} : memref<16x128xf32, #tpu.memory_space<vmem>>, vector<1x16xf32>,
    %c12_i32_228 = arith.constant 12 : i32
    %309 = arith.addi %0, %c12_i32_228 : i32
    %310 = arith.index_cast %309 : i32 to index
    %c3_229 = arith.constant 3 : index
    %311 = memref.load %arg1[%310, %c3_229] : memref<16x4xi32, #tpu.memory_space<smem>>
    %312 = arith.index_cast %311 : i32 to index
    %c0_230 = arith.constant 0 : index
    %313 = vector.load %arg2[%312, %c0_230] : memref<49x16xf32, #tpu.memory_space<vmem>>, vector<1x16xf32>
    %c12_231 = arith.constant 12 : index
    %c48_232 = arith.constant 48 : index
    %314 = vector.load %arg6[%c12_231, %c48_232] : memref<16x128xf32, #tpu.memory_space<vmem>>, vector<1x16xf32>
    tpu.vector_store %arg6[%c12_231, %c48_232], %313 {strides = array<i32>} : memref<16x128xf32, #tpu.memory_space<vmem>>, vector<1x16xf32>,
    %c13_i32 = arith.constant 13 : i32
    %315 = arith.addi %0, %c13_i32 : i32
    %316 = arith.index_cast %315 : i32 to index
    %c0_233 = arith.constant 0 : index
    %317 = memref.load %arg1[%316, %c0_233] : memref<16x4xi32, #tpu.memory_space<smem>>
    %318 = arith.index_cast %317 : i32 to index
    %c0_234 = arith.constant 0 : index
    %319 = vector.load %arg2[%318, %c0_234] : memref<49x16xf32, #tpu.memory_space<vmem>>, vector<1x16xf32>
    %c13 = arith.constant 13 : index
    %c0_235 = arith.constant 0 : index
    %320 = vector.load %arg6[%c13, %c0_235] : memref<16x128xf32, #tpu.memory_space<vmem>>, vector<1x16xf32>
    tpu.vector_store %arg6[%c13, %c0_235], %319 {strides = array<i32>} : memref<16x128xf32, #tpu.memory_space<vmem>>, vector<1x16xf32>,
    %c13_i32_236 = arith.constant 13 : i32
    %321 = arith.addi %0, %c13_i32_236 : i32
    %322 = arith.index_cast %321 : i32 to index
    %c1_237 = arith.constant 1 : index
    %323 = memref.load %arg1[%322, %c1_237] : memref<16x4xi32, #tpu.memory_space<smem>>
    %324 = arith.index_cast %323 : i32 to index
    %c0_238 = arith.constant 0 : index
    %325 = vector.load %arg2[%324, %c0_238] : memref<49x16xf32, #tpu.memory_space<vmem>>, vector<1x16xf32>
    %c13_239 = arith.constant 13 : index
    %c16_240 = arith.constant 16 : index
    %326 = vector.load %arg6[%c13_239, %c16_240] : memref<16x128xf32, #tpu.memory_space<vmem>>, vector<1x16xf32>
    tpu.vector_store %arg6[%c13_239, %c16_240], %325 {strides = array<i32>} : memref<16x128xf32, #tpu.memory_space<vmem>>, vector<1x16xf32>,
    %c13_i32_241 = arith.constant 13 : i32
    %327 = arith.addi %0, %c13_i32_241 : i32
    %328 = arith.index_cast %327 : i32 to index
    %c2_242 = arith.constant 2 : index
    %329 = memref.load %arg1[%328, %c2_242] : memref<16x4xi32, #tpu.memory_space<smem>>
    %330 = arith.index_cast %329 : i32 to index
    %c0_243 = arith.constant 0 : index
    %331 = vector.load %arg2[%330, %c0_243] : memref<49x16xf32, #tpu.memory_space<vmem>>, vector<1x16xf32>
    %c13_244 = arith.constant 13 : index
    %c32_245 = arith.constant 32 : index
    %332 = vector.load %arg6[%c13_244, %c32_245] : memref<16x128xf32, #tpu.memory_space<vmem>>, vector<1x16xf32>
    tpu.vector_store %arg6[%c13_244, %c32_245], %331 {strides = array<i32>} : memref<16x128xf32, #tpu.memory_space<vmem>>, vector<1x16xf32>,
    %c13_i32_246 = arith.constant 13 : i32
    %333 = arith.addi %0, %c13_i32_246 : i32
    %334 = arith.index_cast %333 : i32 to index
    %c3_247 = arith.constant 3 : index
    %335 = memref.load %arg1[%334, %c3_247] : memref<16x4xi32, #tpu.memory_space<smem>>
    %336 = arith.index_cast %335 : i32 to index
    %c0_248 = arith.constant 0 : index
    %337 = vector.load %arg2[%336, %c0_248] : memref<49x16xf32, #tpu.memory_space<vmem>>, vector<1x16xf32>
    %c13_249 = arith.constant 13 : index
    %c48_250 = arith.constant 48 : index
    %338 = vector.load %arg6[%c13_249, %c48_250] : memref<16x128xf32, #tpu.memory_space<vmem>>, vector<1x16xf32>
    tpu.vector_store %arg6[%c13_249, %c48_250], %337 {strides = array<i32>} : memref<16x128xf32, #tpu.memory_space<vmem>>, vector<1x16xf32>,
    %c14_i32 = arith.constant 14 : i32
    %339 = arith.addi %0, %c14_i32 : i32
    %340 = arith.index_cast %339 : i32 to index
    %c0_251 = arith.constant 0 : index
    %341 = memref.load %arg1[%340, %c0_251] : memref<16x4xi32, #tpu.memory_space<smem>>
    %342 = arith.index_cast %341 : i32 to index
    %c0_252 = arith.constant 0 : index
    %343 = vector.load %arg2[%342, %c0_252] : memref<49x16xf32, #tpu.memory_space<vmem>>, vector<1x16xf32>
    %c14 = arith.constant 14 : index
    %c0_253 = arith.constant 0 : index
    %344 = vector.load %arg6[%c14, %c0_253] : memref<16x128xf32, #tpu.memory_space<vmem>>, vector<1x16xf32>
    tpu.vector_store %arg6[%c14, %c0_253], %343 {strides = array<i32>} : memref<16x128xf32, #tpu.memory_space<vmem>>, vector<1x16xf32>,
    %c14_i32_254 = arith.constant 14 : i32
    %345 = arith.addi %0, %c14_i32_254 : i32
    %346 = arith.index_cast %345 : i32 to index
    %c1_255 = arith.constant 1 : index
    %347 = memref.load %arg1[%346, %c1_255] : memref<16x4xi32, #tpu.memory_space<smem>>
    %348 = arith.index_cast %347 : i32 to index
    %c0_256 = arith.constant 0 : index
    %349 = vector.load %arg2[%348, %c0_256] : memref<49x16xf32, #tpu.memory_space<vmem>>, vector<1x16xf32>
    %c14_257 = arith.constant 14 : index
    %c16_258 = arith.constant 16 : index
    %350 = vector.load %arg6[%c14_257, %c16_258] : memref<16x128xf32, #tpu.memory_space<vmem>>, vector<1x16xf32>
    tpu.vector_store %arg6[%c14_257, %c16_258], %349 {strides = array<i32>} : memref<16x128xf32, #tpu.memory_space<vmem>>, vector<1x16xf32>,
    %c14_i32_259 = arith.constant 14 : i32
    %351 = arith.addi %0, %c14_i32_259 : i32
    %352 = arith.index_cast %351 : i32 to index
    %c2_260 = arith.constant 2 : index
    %353 = memref.load %arg1[%352, %c2_260] : memref<16x4xi32, #tpu.memory_space<smem>>
    %354 = arith.index_cast %353 : i32 to index
    %c0_261 = arith.constant 0 : index
    %355 = vector.load %arg2[%354, %c0_261] : memref<49x16xf32, #tpu.memory_space<vmem>>, vector<1x16xf32>
    %c14_262 = arith.constant 14 : index
    %c32_263 = arith.constant 32 : index
    %356 = vector.load %arg6[%c14_262, %c32_263] : memref<16x128xf32, #tpu.memory_space<vmem>>, vector<1x16xf32>
    tpu.vector_store %arg6[%c14_262, %c32_263], %355 {strides = array<i32>} : memref<16x128xf32, #tpu.memory_space<vmem>>, vector<1x16xf32>,
    %c14_i32_264 = arith.constant 14 : i32
    %357 = arith.addi %0, %c14_i32_264 : i32
    %358 = arith.index_cast %357 : i32 to index
    %c3_265 = arith.constant 3 : index
    %359 = memref.load %arg1[%358, %c3_265] : memref<16x4xi32, #tpu.memory_space<smem>>
    %360 = arith.index_cast %359 : i32 to index
    %c0_266 = arith.constant 0 : index
    %361 = vector.load %arg2[%360, %c0_266] : memref<49x16xf32, #tpu.memory_space<vmem>>, vector<1x16xf32>
    %c14_267 = arith.constant 14 : index
    %c48_268 = arith.constant 48 : index
    %362 = vector.load %arg6[%c14_267, %c48_268] : memref<16x128xf32, #tpu.memory_space<vmem>>, vector<1x16xf32>
    tpu.vector_store %arg6[%c14_267, %c48_268], %361 {strides = array<i32>} : memref<16x128xf32, #tpu.memory_space<vmem>>, vector<1x16xf32>,
    %c15_i32 = arith.constant 15 : i32
    %363 = arith.addi %0, %c15_i32 : i32
    %364 = arith.index_cast %363 : i32 to index
    %c0_269 = arith.constant 0 : index
    %365 = memref.load %arg1[%364, %c0_269] : memref<16x4xi32, #tpu.memory_space<smem>>
    %366 = arith.index_cast %365 : i32 to index
    %c0_270 = arith.constant 0 : index
    %367 = vector.load %arg2[%366, %c0_270] : memref<49x16xf32, #tpu.memory_space<vmem>>, vector<1x16xf32>
    %c15 = arith.constant 15 : index
    %c0_271 = arith.constant 0 : index
    %368 = vector.load %arg6[%c15, %c0_271] : memref<16x128xf32, #tpu.memory_space<vmem>>, vector<1x16xf32>
    tpu.vector_store %arg6[%c15, %c0_271], %367 {strides = array<i32>} : memref<16x128xf32, #tpu.memory_space<vmem>>, vector<1x16xf32>,
    %c15_i32_272 = arith.constant 15 : i32
    %369 = arith.addi %0, %c15_i32_272 : i32
    %370 = arith.index_cast %369 : i32 to index
    %c1_273 = arith.constant 1 : index
    %371 = memref.load %arg1[%370, %c1_273] : memref<16x4xi32, #tpu.memory_space<smem>>
    %372 = arith.index_cast %371 : i32 to index
    %c0_274 = arith.constant 0 : index
    %373 = vector.load %arg2[%372, %c0_274] : memref<49x16xf32, #tpu.memory_space<vmem>>, vector<1x16xf32>
    %c15_275 = arith.constant 15 : index
    %c16_276 = arith.constant 16 : index
    %374 = vector.load %arg6[%c15_275, %c16_276] : memref<16x128xf32, #tpu.memory_space<vmem>>, vector<1x16xf32>
    tpu.vector_store %arg6[%c15_275, %c16_276], %373 {strides = array<i32>} : memref<16x128xf32, #tpu.memory_space<vmem>>, vector<1x16xf32>,
    %c15_i32_277 = arith.constant 15 : i32
    %375 = arith.addi %0, %c15_i32_277 : i32
    %376 = arith.index_cast %375 : i32 to index
    %c2_278 = arith.constant 2 : index
    %377 = memref.load %arg1[%376, %c2_278] : memref<16x4xi32, #tpu.memory_space<smem>>
    %378 = arith.index_cast %377 : i32 to index
    %c0_279 = arith.constant 0 : index
    %379 = vector.load %arg2[%378, %c0_279] : memref<49x16xf32, #tpu.memory_space<vmem>>, vector<1x16xf32>
    %c15_280 = arith.constant 15 : index
    %c32_281 = arith.constant 32 : index
    %380 = vector.load %arg6[%c15_280, %c32_281] : memref<16x128xf32, #tpu.memory_space<vmem>>, vector<1x16xf32>
    tpu.vector_store %arg6[%c15_280, %c32_281], %379 {strides = array<i32>} : memref<16x128xf32, #tpu.memory_space<vmem>>, vector<1x16xf32>,
    %c15_i32_282 = arith.constant 15 : i32
    %381 = arith.addi %0, %c15_i32_282 : i32
    %382 = arith.index_cast %381 : i32 to index
    %c3_283 = arith.constant 3 : index
    %383 = memref.load %arg1[%382, %c3_283] : memref<16x4xi32, #tpu.memory_space<smem>>
    %384 = arith.index_cast %383 : i32 to index
    %c0_284 = arith.constant 0 : index
    %385 = vector.load %arg2[%384, %c0_284] : memref<49x16xf32, #tpu.memory_space<vmem>>, vector<1x16xf32>
    %c15_285 = arith.constant 15 : index
    %c48_286 = arith.constant 48 : index
    %386 = vector.load %arg6[%c15_285, %c48_286] : memref<16x128xf32, #tpu.memory_space<vmem>>, vector<1x16xf32>
    tpu.vector_store %arg6[%c15_285, %c48_286], %385 {strides = array<i32>} : memref<16x128xf32, #tpu.memory_space<vmem>>, vector<1x16xf32>,
    %c0_287 = arith.constant 0 : index
    %c0_288 = arith.constant 0 : index
    %387 = vector.load %arg6[%c0_287, %c0_288] : memref<16x128xf32, #tpu.memory_space<vmem>>, vector<16x128xf32>
    %388 = arith.truncf %387 : vector<16x128xf32> to vector<16x128xbf16>
    %c0_289 = arith.constant 0 : index
    %c0_290 = arith.constant 0 : index
    %389 = vector.load %arg3[%c0_289, %c0_290] : memref<128x128xbf16, #tpu.memory_space<vmem>>, vector<128x128xbf16>
    %cst_291 = arith.constant dense<0.000000e+00> : vector<16x128xf32>
    %390 = tpu.matmul %388, %389, %cst_291 {dimension_numbers = #tpu.dot_dimension_numbers<[1], [0], [0], [1], [0, 0, 1, 1], [], []>} : vector<16x128xbf16>, vector<128x128xbf16>, vector<16x128xf32> -> vector<16x128xf32>
    %c0_292 = arith.constant 0 : index
    %c0_293 = arith.constant 0 : index
    %391 = vector.load %arg4[%c0_292, %c0_293] : memref<1x128xf32, #tpu.memory_space<vmem>>, vector<1x128xf32>
    %392 = vector.broadcast %391 : vector<1x128xf32> to vector<16x128xf32>
    %393 = arith.addf %390, %392 : vector<16x128xf32>
    %cst_294 = arith.constant dense<0xFF800000> : vector<16xf32>
    %394 = vector.multi_reduction <maximumf>, %393, %cst_294 [1] : vector<16x128xf32> to vector<16xf32>
    %395 = vector.shape_cast %394 : vector<16xf32> to vector<16x1xf32>
    %396 = vector.broadcast %395 : vector<16x1xf32> to vector<16x128xf32>
    %397 = arith.subf %393, %396 : vector<16x128xf32>
    %398 = math.exp %397 : vector<16x128xf32>
    %cst_295 = arith.constant dense<0.000000e+00> : vector<16xf32>
    %399 = vector.multi_reduction <add>, %398, %cst_295 [1] : vector<16x128xf32> to vector<16xf32>
    %400 = vector.shape_cast %399 : vector<16xf32> to vector<16x1xf32>
    %401 = math.log %400 : vector<16x1xf32>
    %402 = vector.broadcast %401 : vector<16x1xf32> to vector<16x128xf32>
    %403 = arith.subf %397, %402 : vector<16x128xf32>
    %c0_296 = arith.constant 0 : index
    %c0_297 = arith.constant 0 : index
    %404 = vector.load %arg5[%c0_296, %c0_297] : memref<16x128xf32, #tpu.memory_space<vmem>>, vector<16x128xf32>
    tpu.vector_store %arg5[%c0_296, %c0_297], %403 {strides = array<i32>} : memref<16x128xf32, #tpu.memory_space<vmem>>, vector<16x128xf32>,
    return
  }
  func.func @transform_0(%arg0: i32, %arg1: memref<16x4xi32, #tpu.memory_space<smem>>) -> (i32, i32) {
    %c0_i32 = arith.constant 0 : i32
    %c0_i32_0 = arith.constant 0 : i32
    %c0_i32_1 = arith.constant 0 : i32
    return %c0_i32, %c0_i32_0 : i32, i32
  }
  func.func @transform_1(%arg0: i32, %arg1: memref<16x4xi32, #tpu.memory_space<smem>>) -> (i32, i32) {
    %c0_i32 = arith.constant 0 : i32
    %c0_i32_0 = arith.constant 0 : i32
    %c0_i32_1 = arith.constant 0 : i32
    return %c0_i32, %c0_i32_0 : i32, i32
  }
  func.func @transform_2(%arg0: i32, %arg1: memref<16x4xi32, #tpu.memory_space<smem>>) -> (i32, i32) {
    %c0_i32 = arith.constant 0 : i32
    %c0_i32_0 = arith.constant 0 : i32
    %c0_i32_1 = arith.constant 0 : i32
    return %c0_i32, %c0_i32_0 : i32, i32
  }
  func.func @transform_3(%arg0: i32, %arg1: memref<16x4xi32, #tpu.memory_space<smem>>) -> (i32, i32) {
    %c0_i32 = arith.constant 0 : i32
    %c0_i32_0 = arith.constant 0 : i32
    return %arg0, %c0_i32 : i32, i32
  }
}

</mosaic_0001>

<llo_original>
// kernel: cbow_forward.1
$region0: #{cbow_forward.1}
  #allocation0 [shape = 'u32[]', space=smem, size = 0x4, offset = 0x4, fixed_abs, tag = 'smem constant byte address 0x4 - core index']
  #allocation1 [shape = 'u32[72,128]{1,0:T(1,128)}', space=vmem, size = 0x9000, scoped, tag = 'internal scratch']
  #allocation2 [shape = 'f32[16,128]{1,0:T(8,128)}', space=vmem, size = 0x2000, scoped, tag = 'scratch operand']
  #allocation3 [shape = 's32[1]{0}', space=sflag, size = 0x4, scoped, tag = 'scoped memory for cbow_forward.1']
  #allocation4 [shape = 'u8[8192]{0}', space=smem, size = 0x2000, scoped, tag = 'prefetched SMEM operand 0']
  %s0 = inlined_call_operand.vmem [shape: s32[16,4], index: 0, kind: input, shape index: {}]
  %s1 = inlined_call_operand.vmem [shape: f32[49,16], index: 1, kind: input, shape index: {}]
  %s2 = inlined_call_operand.vmem [shape: bf16[128,128], index: 2, kind: input, shape index: {}]
  %s3 = inlined_call_operand.vmem [shape: f32[1,128], index: 3, kind: input, shape index: {}]
  %s4 = inlined_call_operand.vmem [shape: f32[16,128], index: 4, kind: output, shape index: {}]
  %s5 = sld [smem:[#allocation0]]
  $region22: #{cbow_forward.1} parent=0
    _
  %s7 = ssub.s32 1, %s5
  %s8 = scalar_select 0, %s7, %s5
  %s10 = sshll.u32 %s0, 4
  %s11 = int_to_ptr.vmem [resolvable:$true] %s10
  %13 = dma.vmem_to_smem %s11, 256, [#allocation4], [#allocation3]
  %15 = dma.done [#allocation3], 256
  %16 = sfence
  // Predicated region
  $region2: #{cbow_forward.1} parent=0 // pred_check
    _
  $region3: #{cbow_forward.1} parent=0 // pred_check_branch
    %18 = sbr.rel (0) target = $region5
  $region4: #{cbow_forward.1} parent=0 // pred_region
    _
  $region5: #{cbow_forward.1} parent=0 // pred_fallthru
    _
  // Predicated region
  $region6: #{cbow_forward.1} parent=0 // pred_check
    _
  $region7: #{cbow_forward.1} parent=0 // pred_check_branch
    %20 = sbr.rel (0) target = $region9
  $region8: #{cbow_forward.1} parent=0 // pred_region
    _
  $region9: #{cbow_forward.1} parent=0 // pred_fallthru
    _
  // Predicated region
  $region10: #{cbow_forward.1} parent=0 // pred_check
    _
  $region11: #{cbow_forward.1} parent=0 // pred_check_branch
    %22 = sbr.rel (0) target = $region13
  $region12: #{cbow_forward.1} parent=0 // pred_region
    _
  $region13: #{cbow_forward.1} parent=0 // pred_fallthru
    _
  %s23 = smul.u32 0, 16
  %24 = vst [vmem:[#allocation2] sm:$0xff] 0.0
  %25 = vst [vmem:[#allocation2 + $0x8] sm:$0xff] 0.0
  %s26 = smul.u32 %s23, 128
  %s27 = sld [smem:[#allocation4 + %s26]]
  %s28 = scalar_lea.vmem %s1, %s27
  %v29 = vld [vmem:[%s28] sm:$0x1]
  %vm30 = vcmask 122880
  %31 = vst.msk [vmem:[#allocation2] sm:$0x1] %vm30, %v29
  %s32 = sadd.s32 %s26, 1
  %s33 = sld [smem:[#allocation4 + %s32]]
  %s34 = scalar_lea.vmem %s1, %s33
  %v35 = vld [vmem:[%s34] sm:$0x1]
  %37 = vrot.lane.b32.xlu0 %v35, 16
  %v38 = vpop.permute.xlu0 %37
  %vm40 = vcmask 254080
  %41 = vst.msk [vmem:[#allocation2] sm:$0x1] %vm40, %v38
  %s42 = sadd.s32 %s26, 2
  %s43 = sld [smem:[#allocation4 + %s42]]
  %s44 = scalar_lea.vmem %s1, %s43
  %v45 = vld [vmem:[%s44] sm:$0x1]
  %47 = vrot.lane.b32.xlu0 %v45, 32
  %v48 = vpop.permute.xlu0 %47
  %vm50 = vcmask 385280
  %51 = vst.msk [vmem:[#allocation2] sm:$0x1] %vm50, %v48
  %s52 = sadd.s32 %s26, 3
  %s53 = sld [smem:[#allocation4 + %s52]]
  %s54 = scalar_lea.vmem %s1, %s53
  %v55 = vld [vmem:[%s54] sm:$0x1]
  %57 = vrot.lane.b32.xlu0 %v55, 48
  %v58 = vpop.permute.xlu0 %57
  %vm60 = vcmask 516480
  %61 = vst.msk [vmem:[#allocation2] sm:$0x1] %vm60, %v58
  %s62 = sadd.s32 %s23, 1
  %s63 = smul.u32 %s62, 128
  %s64 = sld [smem:[#allocation4 + %s63]]
  %s65 = scalar_lea.vmem %s1, %s64
  %v66 = vld [vmem:[%s65] sm:$0x1]
  %67 = vst.msk [vmem:[#allocation2 + $0x1] sm:$0x1] %vm30, %v66
  %s68 = sadd.s32 %s63, 1
  %s69 = sld [smem:[#allocation4 + %s68]]
  %s70 = scalar_lea.vmem %s1, %s69
  %v71 = vld [vmem:[%s70] sm:$0x1]
  %73 = vrot.lane.b32.xlu0 %v71, 16
  %v74 = vpop.permute.xlu0 %73
  %76 = vst.msk [vmem:[#allocation2 + $0x1] sm:$0x1] %vm40, %v74
  %s77 = sadd.s32 %s63, 2
  %s78 = sld [smem:[#allocation4 + %s77]]
  %s79 = scalar_lea.vmem %s1, %s78
  %v80 = vld [vmem:[%s79] sm:$0x1]
  %82 = vrot.lane.b32.xlu0 %v80, 32
  %v83 = vpop.permute.xlu0 %82
  %85 = vst.msk [vmem:[#allocation2 + $0x1] sm:$0x1] %vm50, %v83
  %s86 = sadd.s32 %s63, 3
  %s87 = sld [smem:[#allocation4 + %s86]]
  %s88 = scalar_lea.vmem %s1, %s87
  %v89 = vld [vmem:[%s88] sm:$0x1]
  %91 = vrot.lane.b32.xlu0 %v89, 48
  %v92 = vpop.permute.xlu0 %91
  %94 = vst.msk [vmem:[#allocation2 + $0x1] sm:$0x1] %vm60, %v92
  %s95 = sadd.s32 %s23, 2
  %s96 = smul.u32 %s95, 128
  %s97 = sld [smem:[#allocation4 + %s96]]
  %s98 = scalar_lea.vmem %s1, %s97
  %v99 = vld [vmem:[%s98] sm:$0x1]
  %100 = vst.msk [vmem:[#allocation2 + $0x2] sm:$0x1] %vm30, %v99
  %s101 = sadd.s32 %s96, 1
  %s102 = sld [smem:[#allocation4 + %s101]]
  %s103 = scalar_lea.vmem %s1, %s102
  %v104 = vld [vmem:[%s103] sm:$0x1]
  %106 = vrot.lane.b32.xlu0 %v104, 16
  %v107 = vpop.permute.xlu0 %106
  %109 = vst.msk [vmem:[#allocation2 + $0x2] sm:$0x1] %vm40, %v107
  %s110 = sadd.s32 %s96, 2
  %s111 = sld [smem:[#allocation4 + %s110]]
  %s112 = scalar_lea.vmem %s1, %s111
  %v113 = vld [vmem:[%s112] sm:$0x1]
  %115 = vrot.lane.b32.xlu0 %v113, 32
  %v116 = vpop.permute.xlu0 %115
  %118 = vst.msk [vmem:[#allocation2 + $0x2] sm:$0x1] %vm50, %v116
  %s119 = sadd.s32 %s96, 3
  %s120 = sld [smem:[#allocation4 + %s119]]
  %s121 = scalar_lea.vmem %s1, %s120
  %v122 = vld [vmem:[%s121] sm:$0x1]
  %124 = vrot.lane.b32.xlu0 %v122, 48
  %v125 = vpop.permute.xlu0 %124
  %127 = vst.msk [vmem:[#allocation2 + $0x2] sm:$0x1] %vm60, %v125
  %s128 = sadd.s32 %s23, 3
  %s129 = smul.u32 %s128, 128
  %s130 = sld [smem:[#allocation4 + %s129]]
  %s131 = scalar_lea.vmem %s1, %s130
  %v132 = vld [vmem:[%s131] sm:$0x1]
  %133 = vst.msk [vmem:[#allocation2 + $0x3] sm:$0x1] %vm30, %v132
  %s134 = sadd.s32 %s129, 1
  %s135 = sld [smem:[#allocation4 + %s134]]
  %s136 = scalar_lea.vmem %s1, %s135
  %v137 = vld [vmem:[%s136] sm:$0x1]
  %139 = vrot.lane.b32.xlu0 %v137, 16
  %v140 = vpop.permute.xlu0 %139
  %142 = vst.msk [vmem:[#allocation2 + $0x3] sm:$0x1] %vm40, %v140
  %s143 = sadd.s32 %s129, 2
  %s144 = sld [smem:[#allocation4 + %s143]]
  %s145 = scalar_lea.vmem %s1, %s144
  %v146 = vld [vmem:[%s145] sm:$0x1]
  %148 = vrot.lane.b32.xlu0 %v146, 32
  %v149 = vpop.permute.xlu0 %148
  %151 = vst.msk [vmem:[#allocation2 + $0x3] sm:$0x1] %vm50, %v149
  %s152 = sadd.s32 %s129, 3
  %s153 = sld [smem:[#allocation4 + %s152]]
  %s154 = scalar_lea.vmem %s1, %s153
  %v155 = vld [vmem:[%s154] sm:$0x1]
  %157 = vrot.lane.b32.xlu0 %v155, 48
  %v158 = vpop.permute.xlu0 %157
  %160 = vst.msk [vmem:[#allocation2 + $0x3] sm:$0x1] %vm60, %v158
  %s161 = sadd.s32 %s23, 4
  %s162 = smul.u32 %s161, 128
  %s163 = sld [smem:[#allocation4 + %s162]]
  %s164 = scalar_lea.vmem %s1, %s163
  %v165 = vld [vmem:[%s164] sm:$0x1]
  %166 = vst.msk [vmem:[#allocation2 + $0x4] sm:$0x1] %vm30, %v165
  %s167 = sadd.s32 %s162, 1
  %s168 = sld [smem:[#allocation4 + %s167]]
  %s169 = scalar_lea.vmem %s1, %s168
  %v170 = vld [vmem:[%s169] sm:$0x1]
  %172 = vrot.lane.b32.xlu0 %v170, 16
  %v173 = vpop.permute.xlu0 %172
  %175 = vst.msk [vmem:[#allocation2 + $0x4] sm:$0x1] %vm40, %v173
  %s176 = sadd.s32 %s162, 2
  %s177 = sld [smem:[#allocation4 + %s176]]
  %s178 = scalar_lea.vmem %s1, %s177
  %v179 = vld [vmem:[%s178] sm:$0x1]
  %181 = vrot.lane.b32.xlu0 %v179, 32
  %v182 = vpop.permute.xlu0 %181
  %184 = vst.msk [vmem:[#allocation2 + $0x4] sm:$0x1] %vm50, %v182
  %s185 = sadd.s32 %s162, 3
  %s186 = sld [smem:[#allocation4 + %s185]]
  %s187 = scalar_lea.vmem %s1, %s186
  %v188 = vld [vmem:[%s187] sm:$0x1]
  %190 = vrot.lane.b32.xlu0 %v188, 48
  %v191 = vpop.permute.xlu0 %190
  %193 = vst.msk [vmem:[#allocation2 + $0x4] sm:$0x1] %vm60, %v191
  %s194 = sadd.s32 %s23, 5
  %s195 = smul.u32 %s194, 128
  %s196 = sld [smem:[#allocation4 + %s195]]
  %s197 = scalar_lea.vmem %s1, %s196
  %v198 = vld [vmem:[%s197] sm:$0x1]
  %199 = vst.msk [vmem:[#allocation2 + $0x5] sm:$0x1] %vm30, %v198
  %s200 = sadd.s32 %s195, 1
  %s201 = sld [smem:[#allocation4 + %s200]]
  %s202 = scalar_lea.vmem %s1, %s201
  %v203 = vld [vmem:[%s202] sm:$0x1]
  %205 = vrot.lane.b32.xlu0 %v203, 16
  %v206 = vpop.permute.xlu0 %205
  %208 = vst.msk [vmem:[#allocation2 + $0x5] sm:$0x1] %vm40, %v206
  %s209 = sadd.s32 %s195, 2
  %s210 = sld [smem:[#allocation4 + %s209]]
  %s211 = scalar_lea.vmem %s1, %s210
  %v212 = vld [vmem:[%s211] sm:$0x1]
  %214 = vrot.lane.b32.xlu0 %v212, 32
  %v215 = vpop.permute.xlu0 %214
  %217 = vst.msk [vmem:[#allocation2 + $0x5] sm:$0x1] %vm50, %v215
  %s218 = sadd.s32 %s195, 3
  %s219 = sld [smem:[#allocation4 + %s218]]
  %s220 = scalar_lea.vmem %s1, %s219
  %v221 = vld [vmem:[%s220] sm:$0x1]
  %223 = vrot.lane.b32.xlu0 %v221, 48
  %v224 = vpop.permute.xlu0 %223
  %226 = vst.msk [vmem:[#allocation2 + $0x5] sm:$0x1] %vm60, %v224
  %s227 = sadd.s32 %s23, 6
  %s228 = smul.u32 %s227, 128
  %s229 = sld [smem:[#allocation4 + %s228]]
  %s230 = scalar_lea.vmem %s1, %s229
  %v231 = vld [vmem:[%s230] sm:$0x1]
  %232 = vst.msk [vmem:[#allocation2 + $0x6] sm:$0x1] %vm30, %v231
  %s233 = sadd.s32 %s228, 1
  %s234 = sld [smem:[#allocation4 + %s233]]
  %s235 = scalar_lea.vmem %s1, %s234
  %v236 = vld [vmem:[%s235] sm:$0x1]
  %238 = vrot.lane.b32.xlu0 %v236, 16
  %v239 = vpop.permute.xlu0 %238
  %241 = vst.msk [vmem:[#allocation2 + $0x6] sm:$0x1] %vm40, %v239
  %s242 = sadd.s32 %s228, 2
  %s243 = sld [smem:[#allocation4 + %s242]]
  %s244 = scalar_lea.vmem %s1, %s243
  %v245 = vld [vmem:[%s244] sm:$0x1]
  %247 = vrot.lane.b32.xlu0 %v245, 32
  %v248 = vpop.permute.xlu0 %247
  %250 = vst.msk [vmem:[#allocation2 + $0x6] sm:$0x1] %vm50, %v248
  %s251 = sadd.s32 %s228, 3
  %s252 = sld [smem:[#allocation4 + %s251]]
  %s253 = scalar_lea.vmem %s1, %s252
  %v254 = vld [vmem:[%s253] sm:$0x1]
  %256 = vrot.lane.b32.xlu0 %v254, 48
  %v257 = vpop.permute.xlu0 %256
  %259 = vst.msk [vmem:[#allocation2 + $0x6] sm:$0x1] %vm60, %v257
  %s260 = sadd.s32 %s23, 7
  %s261 = smul.u32 %s260, 128
  %s262 = sld [smem:[#allocation4 + %s261]]
  %s263 = scalar_lea.vmem %s1, %s262
  %v264 = vld [vmem:[%s263] sm:$0x1]
  %265 = vst.msk [vmem:[#allocation2 + $0x7] sm:$0x1] %vm30, %v264
  %s266 = sadd.s32 %s261, 1
  %s267 = sld [smem:[#allocation4 + %s266]]
  %s268 = scalar_lea.vmem %s1, %s267
  %v269 = vld [vmem:[%s268] sm:$0x1]
  %271 = vrot.lane.b32.xlu0 %v269, 16
  %v272 = vpop.permute.xlu0 %271
  %274 = vst.msk [vmem:[#allocation2 + $0x7] sm:$0x1] %vm40, %v272
  %s275 = sadd.s32 %s261, 2
  %s276 = sld [smem:[#allocation4 + %s275]]
  %s277 = scalar_lea.vmem %s1, %s276
  %v278 = vld [vmem:[%s277] sm:$0x1]
  %280 = vrot.lane.b32.xlu0 %v278, 32
  %v281 = vpop.permute.xlu0 %280
  %283 = vst.msk [vmem:[#allocation2 + $0x7] sm:$0x1] %vm50, %v281
  %s284 = sadd.s32 %s261, 3
  %s285 = sld [smem:[#allocation4 + %s284]]
  %s286 = scalar_lea.vmem %s1, %s285
  %v287 = vld [vmem:[%s286] sm:$0x1]
  %289 = vrot.lane.b32.xlu0 %v287, 48
  %v290 = vpop.permute.xlu0 %289
  %292 = vst.msk [vmem:[#allocation2 + $0x7] sm:$0x1] %vm60, %v290
  %s293 = sadd.s32 %s23, 8
  %s294 = smul.u32 %s293, 128
  %s295 = sld [smem:[#allocation4 + %s294]]
  %s296 = scalar_lea.vmem %s1, %s295
  %v297 = vld [vmem:[%s296] sm:$0x1]
  %298 = vst.msk [vmem:[#allocation2 + $0x8] sm:$0x1] %vm30, %v297
  %s299 = sadd.s32 %s294, 1
  %s300 = sld [smem:[#allocation4 + %s299]]
  %s301 = scalar_lea.vmem %s1, %s300
  %v302 = vld [vmem:[%s301] sm:$0x1]
  %304 = vrot.lane.b32.xlu0 %v302, 16
  %v305 = vpop.permute.xlu0 %304
  %307 = vst.msk [vmem:[#allocation2 + $0x8] sm:$0x1] %vm40, %v305
  %s308 = sadd.s32 %s294, 2
  %s309 = sld [smem:[#allocation4 + %s308]]
  %s310 = scalar_lea.vmem %s1, %s309
  %v311 = vld [vmem:[%s310] sm:$0x1]
  %313 = vrot.lane.b32.xlu0 %v311, 32
  %v314 = vpop.permute.xlu0 %313
  %316 = vst.msk [vmem:[#allocation2 + $0x8] sm:$0x1] %vm50, %v314
  %s317 = sadd.s32 %s294, 3
  %s318 = sld [smem:[#allocation4 + %s317]]
  %s319 = scalar_lea.vmem %s1, %s318
  %v320 = vld [vmem:[%s319] sm:$0x1]
  %322 = vrot.lane.b32.xlu0 %v320, 48
  %v323 = vpop.permute.xlu0 %322
  %325 = vst.msk [vmem:[#allocation2 + $0x8] sm:$0x1] %vm60, %v323
  %s326 = sadd.s32 %s23, 9
  %s327 = smul.u32 %s326, 128
  %s328 = sld [smem:[#allocation4 + %s327]]
  %s329 = scalar_lea.vmem %s1, %s328
  %v330 = vld [vmem:[%s329] sm:$0x1]
  %331 = vst.msk [vmem:[#allocation2 + $0x9] sm:$0x1] %vm30, %v330
  %s332 = sadd.s32 %s327, 1
  %s333 = sld [smem:[#allocation4 + %s332]]
  %s334 = scalar_lea.vmem %s1, %s333
  %v335 = vld [vmem:[%s334] sm:$0x1]
  %337 = vrot.lane.b32.xlu0 %v335, 16
  %v338 = vpop.permute.xlu0 %337
  %340 = vst.msk [vmem:[#allocation2 + $0x9] sm:$0x1] %vm40, %v338
  %s341 = sadd.s32 %s327, 2
  %s342 = sld [smem:[#allocation4 + %s341]]
  %s343 = scalar_lea.vmem %s1, %s342
  %v344 = vld [vmem:[%s343] sm:$0x1]
  %346 = vrot.lane.b32.xlu0 %v344, 32
  %v347 = vpop.permute.xlu0 %346
  %349 = vst.msk [vmem:[#allocation2 + $0x9] sm:$0x1] %vm50, %v347
  %s350 = sadd.s32 %s327, 3
  %s351 = sld [smem:[#allocation4 + %s350]]
  %s352 = scalar_lea.vmem %s1, %s351
  %v353 = vld [vmem:[%s352] sm:$0x1]
  %355 = vrot.lane.b32.xlu0 %v353, 48
  %v356 = vpop.permute.xlu0 %355
  %358 = vst.msk [vmem:[#allocation2 + $0x9] sm:$0x1] %vm60, %v356
  %s359 = sadd.s32 %s23, 10
  %s360 = smul.u32 %s359, 128
  %s361 = sld [smem:[#allocation4 + %s360]]
  %s362 = scalar_lea.vmem %s1, %s361
  %v363 = vld [vmem:[%s362] sm:$0x1]
  %364 = vst.msk [vmem:[#allocation2 + $0xa] sm:$0x1] %vm30, %v363
  %s365 = sadd.s32 %s360, 1
  %s366 = sld [smem:[#allocation4 + %s365]]
  %s367 = scalar_lea.vmem %s1, %s366
  %v368 = vld [vmem:[%s367] sm:$0x1]
  %370 = vrot.lane.b32.xlu0 %v368, 16
  %v371 = vpop.permute.xlu0 %370
  %373 = vst.msk [vmem:[#allocation2 + $0xa] sm:$0x1] %vm40, %v371
  %s374 = sadd.s32 %s360, 2
  %s375 = sld [smem:[#allocation4 + %s374]]
  %s376 = scalar_lea.vmem %s1, %s375
  %v377 = vld [vmem:[%s376] sm:$0x1]
  %379 = vrot.lane.b32.xlu0 %v377, 32
  %v380 = vpop.permute.xlu0 %379
  %382 = vst.msk [vmem:[#allocation2 + $0xa] sm:$0x1] %vm50, %v380
  %s383 = sadd.s32 %s360, 3
  %s384 = sld [smem:[#allocation4 + %s383]]
  %s385 = scalar_lea.vmem %s1, %s384
  %v386 = vld [vmem:[%s385] sm:$0x1]
  %388 = vrot.lane.b32.xlu0 %v386, 48
  %v389 = vpop.permute.xlu0 %388
  %391 = vst.msk [vmem:[#allocation2 + $0xa] sm:$0x1] %vm60, %v389
  %s392 = sadd.s32 %s23, 11
  %s393 = smul.u32 %s392, 128
  %s394 = sld [smem:[#allocation4 + %s393]]
  %s395 = scalar_lea.vmem %s1, %s394
  %v396 = vld [vmem:[%s395] sm:$0x1]
  %397 = vst.msk [vmem:[#allocation2 + $0xb] sm:$0x1] %vm30, %v396
  %s398 = sadd.s32 %s393, 1
  %s399 = sld [smem:[#allocation4 + %s398]]
  %s400 = scalar_lea.vmem %s1, %s399
  %v401 = vld [vmem:[%s400] sm:$0x1]
  %403 = vrot.lane.b32.xlu0 %v401, 16
  %v404 = vpop.permute.xlu0 %403
  %406 = vst.msk [vmem:[#allocation2 + $0xb] sm:$0x1] %vm40, %v404
  %s407 = sadd.s32 %s393, 2
  %s408 = sld [smem:[#allocation4 + %s407]]
  %s409 = scalar_lea.vmem %s1, %s408
  %v410 = vld [vmem:[%s409] sm:$0x1]
  %412 = vrot.lane.b32.xlu0 %v410, 32
  %v413 = vpop.permute.xlu0 %412
  %415 = vst.msk [vmem:[#allocation2 + $0xb] sm:$0x1] %vm50, %v413
  %s416 = sadd.s32 %s393, 3
  %s417 = sld [smem:[#allocation4 + %s416]]
  %s418 = scalar_lea.vmem %s1, %s417
  %v419 = vld [vmem:[%s418] sm:$0x1]
  %421 = vrot.lane.b32.xlu0 %v419, 48
  %v422 = vpop.permute.xlu0 %421
  %424 = vst.msk [vmem:[#allocation2 + $0xb] sm:$0x1] %vm60, %v422
  %s425 = sadd.s32 %s23, 12
  %s426 = smul.u32 %s425, 128
  %s427 = sld [smem:[#allocation4 + %s426]]
  %s428 = scalar_lea.vmem %s1, %s427
  %v429 = vld [vmem:[%s428] sm:$0x1]
  %430 = vst.msk [vmem:[#allocation2 + $0xc] sm:$0x1] %vm30, %v429
  %s431 = sadd.s32 %s426, 1
  %s432 = sld [smem:[#allocation4 + %s431]]
  %s433 = scalar_lea.vmem %s1, %s432
  %v434 = vld [vmem:[%s433] sm:$0x1]
  %436 = vrot.lane.b32.xlu0 %v434, 16
  %v437 = vpop.permute.xlu0 %436
  %439 = vst.msk [vmem:[#allocation2 + $0xc] sm:$0x1] %vm40, %v437
  %s440 = sadd.s32 %s426, 2
  %s441 = sld [smem:[#allocation4 + %s440]]
  %s442 = scalar_lea.vmem %s1, %s441
  %v443 = vld [vmem:[%s442] sm:$0x1]
  %445 = vrot.lane.b32.xlu0 %v443, 32
  %v446 = vpop.permute.xlu0 %445
  %448 = vst.msk [vmem:[#allocation2 + $0xc] sm:$0x1] %vm50, %v446
  %s449 = sadd.s32 %s426, 3
  %s450 = sld [smem:[#allocation4 + %s449]]
  %s451 = scalar_lea.vmem %s1, %s450
  %v452 = vld [vmem:[%s451] sm:$0x1]
  %454 = vrot.lane.b32.xlu0 %v452, 48
  %v455 = vpop.permute.xlu0 %454
  %457 = vst.msk [vmem:[#allocation2 + $0xc] sm:$0x1] %vm60, %v455
  %s458 = sadd.s32 %s23, 13
  %s459 = smul.u32 %s458, 128
  %s460 = sld [smem:[#allocation4 + %s459]]
  %s461 = scalar_lea.vmem %s1, %s460
  %v462 = vld [vmem:[%s461] sm:$0x1]
  %463 = vst.msk [vmem:[#allocation2 + $0xd] sm:$0x1] %vm30, %v462
  %s464 = sadd.s32 %s459, 1
  %s465 = sld [smem:[#allocation4 + %s464]]
  %s466 = scalar_lea.vmem %s1, %s465
  %v467 = vld [vmem:[%s466] sm:$0x1]
  %469 = vrot.lane.b32.xlu0 %v467, 16
  %v470 = vpop.permute.xlu0 %469
  %472 = vst.msk [vmem:[#allocation2 + $0xd] sm:$0x1] %vm40, %v470
  %s473 = sadd.s32 %s459, 2
  %s474 = sld [smem:[#allocation4 + %s473]]
  %s475 = scalar_lea.vmem %s1, %s474
  %v476 = vld [vmem:[%s475] sm:$0x1]
  %478 = vrot.lane.b32.xlu0 %v476, 32
  %v479 = vpop.permute.xlu0 %478
  %481 = vst.msk [vmem:[#allocation2 + $0xd] sm:$0x1] %vm50, %v479
  %s482 = sadd.s32 %s459, 3
  %s483 = sld [smem:[#allocation4 + %s482]]
  %s484 = scalar_lea.vmem %s1, %s483
  %v485 = vld [vmem:[%s484] sm:$0x1]
  %487 = vrot.lane.b32.xlu0 %v485, 48
  %v488 = vpop.permute.xlu0 %487
  %490 = vst.msk [vmem:[#allocation2 + $0xd] sm:$0x1] %vm60, %v488
  %s491 = sadd.s32 %s23, 14
  %s492 = smul.u32 %s491, 128
  %s493 = sld [smem:[#allocation4 + %s492]]
  %s494 = scalar_lea.vmem %s1, %s493
  %v495 = vld [vmem:[%s494] sm:$0x1]
  %496 = vst.msk [vmem:[#allocation2 + $0xe] sm:$0x1] %vm30, %v495
  %s497 = sadd.s32 %s492, 1
  %s498 = sld [smem:[#allocation4 + %s497]]
  %s499 = scalar_lea.vmem %s1, %s498
  %v500 = vld [vmem:[%s499] sm:$0x1]
  %502 = vrot.lane.b32.xlu0 %v500, 16
  %v503 = vpop.permute.xlu0 %502
  %505 = vst.msk [vmem:[#allocation2 + $0xe] sm:$0x1] %vm40, %v503
  %s506 = sadd.s32 %s492, 2
  %s507 = sld [smem:[#allocation4 + %s506]]
  %s508 = scalar_lea.vmem %s1, %s507
  %v509 = vld [vmem:[%s508] sm:$0x1]
  %511 = vrot.lane.b32.xlu0 %v509, 32
  %v512 = vpop.permute.xlu0 %511
  %514 = vst.msk [vmem:[#allocation2 + $0xe] sm:$0x1] %vm50, %v512
  %s515 = sadd.s32 %s492, 3
  %s516 = sld [smem:[#allocation4 + %s515]]
  %s517 = scalar_lea.vmem %s1, %s516
  %v518 = vld [vmem:[%s517] sm:$0x1]
  %520 = vrot.lane.b32.xlu0 %v518, 48
  %v521 = vpop.permute.xlu0 %520
  %523 = vst.msk [vmem:[#allocation2 + $0xe] sm:$0x1] %vm60, %v521
  %s524 = sadd.s32 %s23, 15
  %s525 = smul.u32 %s524, 128
  %s526 = sld [smem:[#allocation4 + %s525]]
  %s527 = scalar_lea.vmem %s1, %s526
  %v528 = vld [vmem:[%s527] sm:$0x1]
  %529 = vst.msk [vmem:[#allocation2 + $0xf] sm:$0x1] %vm30, %v528
  %s530 = sadd.s32 %s525, 1
  %s531 = sld [smem:[#allocation4 + %s530]]
  %s532 = scalar_lea.vmem %s1, %s531
  %v533 = vld [vmem:[%s532] sm:$0x1]
  %535 = vrot.lane.b32.xlu0 %v533, 16
  %v536 = vpop.permute.xlu0 %535
  %538 = vst.msk [vmem:[#allocation2 + $0xf] sm:$0x1] %vm40, %v536
  %s539 = sadd.s32 %s525, 2
  %s540 = sld [smem:[#allocation4 + %s539]]
  %s541 = scalar_lea.vmem %s1, %s540
  %v542 = vld [vmem:[%s541] sm:$0x1]
  %544 = vrot.lane.b32.xlu0 %v542, 32
  %v545 = vpop.permute.xlu0 %544
  %547 = vst.msk [vmem:[#allocation2 + $0xf] sm:$0x1] %vm50, %v545
  %s548 = sadd.s32 %s525, 3
  %s549 = sld [smem:[#allocation4 + %s548]]
  %s550 = scalar_lea.vmem %s1, %s549
  %v551 = vld [vmem:[%s550] sm:$0x1]
  %553 = vrot.lane.b32.xlu0 %v551, 48
  %v554 = vpop.permute.xlu0 %553
  %556 = vst.msk [vmem:[#allocation2 + $0xf] sm:$0x1] %vm60, %v554
  %v557 = vld [vmem:[#allocation2] sm:$0xff]
  %v558 = vld [vmem:[#allocation2 + $0x8] sm:$0xff]
  %v559 = vpack.c.bf16 %v558, %v557
  %v560 = vld [vmem:[%s2] sm:$0xf]
  %v561 = vld [vmem:[%s2 + $0x4] sm:$0xf]
  %v562 = vld [vmem:[%s2 + $0x8] sm:$0xf]
  %v563 = vld [vmem:[%s2 + $0xc] sm:$0xf]
  %v564 = vld [vmem:[%s2 + $0x10] sm:$0xf]
  %v565 = vld [vmem:[%s2 + $0x14] sm:$0xf]
  %v566 = vld [vmem:[%s2 + $0x18] sm:$0xf]
  %v567 = vld [vmem:[%s2 + $0x1c] sm:$0xf]
  %v568 = vld [vmem:[%s2 + $0x20] sm:$0xf]
  %v569 = vld [vmem:[%s2 + $0x24] sm:$0xf]
  %v570 = vld [vmem:[%s2 + $0x28] sm:$0xf]
  %v571 = vld [vmem:[%s2 + $0x2c] sm:$0xf]
  %v572 = vld [vmem:[%s2 + $0x30] sm:$0xf]
  %v573 = vld [vmem:[%s2 + $0x34] sm:$0xf]
  %v574 = vld [vmem:[%s2 + $0x38] sm:$0xf]
  %v575 = vld [vmem:[%s2 + $0x3c] sm:$0xf]
  %v576 = vld [vmem:[%s3] sm:$0x1]
  %v578 = vperm.slane %v576, 0
  %v596 = vunpack.c.l.b16 %v560
  %v597 = vunpack.c.l.b16 %v561
  %v598 = vunpack.c.l.b16 %v562
  %v599 = vunpack.c.l.b16 %v563
  %v600 = vunpack.c.l.b16 %v564
  %v601 = vunpack.c.l.b16 %v565
  %v602 = vunpack.c.l.b16 %v566
  %v603 = vunpack.c.l.b16 %v567
  %v604 = vunpack.c.l.b16 %v568
  %v605 = vunpack.c.l.b16 %v569
  %v606 = vunpack.c.l.b16 %v570
  %v607 = vunpack.c.l.b16 %v571
  %v608 = vunpack.c.l.b16 %v572
  %v609 = vunpack.c.l.b16 %v573
  %v610 = vunpack.c.l.b16 %v574
  %v611 = vunpack.c.l.b16 %v575
  %v612 = vpack.c.b16 %v597, %v596
  %v613 = vpack.c.b16 %v599, %v598
  %v614 = vpack.c.b16 %v601, %v600
  %v615 = vpack.c.b16 %v603, %v602
  %v616 = vpack.c.b16 %v605, %v604
  %v617 = vpack.c.b16 %v607, %v606
  %v618 = vpack.c.b16 %v609, %v608
  %v619 = vpack.c.b16 %v611, %v610
  %628 = vmatpush.bf16.msra.mxu0 %v619
  %629 = vmatpush.bf16.msra.mxu0 %v618
  %630 = vmatpush.bf16.msra.mxu0 %v617
  %631 = vmatpush.bf16.msra.mxu0 %v616
  %632 = vmatpush.bf16.msra.mxu0 %v615
  %633 = vmatpush.bf16.msra.mxu0 %v614
  %634 = vmatpush.bf16.msra.mxu0 %v613
  %635 = vmatpush.bf16.msra.mxu0 %v612
  %636 = vmatmul.bf16.gmra.mxu0 %v559
  %v637 = vpop.f32.mrf.mxu0
  %v638 = vadd.f32 %v578, %v637
  %v639 = vpop.f32.mrf.mxu0
  %v640 = vadd.f32 %v578, %v639
  %641 = vdwg.mxu0
  %642 = vmax.xlane.f32.xlu0 %v638
  %v643 = vpop.xlane.xlu0 %642
  %644 = vmax.xlane.f32.xlu0 %v640
  %v645 = vpop.xlane.xlu0 %644
  %v646 = vsub.f32 %v638, %v643
  %v647 = vsub.f32 %v640, %v645
  %v648 = vmul.f32 %v646, 1.442695
  %v649 = vpow.pop %v648
  %v650 = vmul.f32 %v647, 1.442695
  %v651 = vpow.pop %v650
  %652 = vadd.xlane.f32.xlu0 %v649
  %v653 = vpop.xlane.xlu0 %652
  %654 = vadd.xlane.f32.xlu0 %v651
  %v655 = vpop.xlane.xlu0 %654
  %v656 = vlog2.pop %v653
  %v657 = vmul.f32 %v656, 0.6931472
  %v658 = vlog2.pop %v655
  %v659 = vmul.f32 %v658, 0.6931472
  %v660 = vsub.f32 %v646, %v657
  %v661 = vsub.f32 %v647, %v659
  %662 = vst [vmem:[%s4] sm:$0xff] %v660
  %663 = vst [vmem:[%s4 + $0x8] sm:$0xff] %v661
  // Predicated region
  $region14: #{cbow_forward.1} parent=0 // pred_check
    _
  $region15: #{cbow_forward.1} parent=0 // pred_check_branch
    %665 = sbr.rel (0) target = $region17
  $region16: #{cbow_forward.1} parent=0 // pred_region
    _
  $region17: #{cbow_forward.1} parent=0 // pred_fallthru
    _
  // Predicated region
  $region18: #{cbow_forward.1} parent=0 // pred_check
    _
  $region19: #{cbow_forward.1} parent=0 // pred_check_branch
    %667 = sbr.rel (0) target = $region21
  $region20: #{cbow_forward.1} parent=0 // pred_region
    _
  $region21: #{cbow_forward.1} parent=0 // pred_fallthru
    _

</llo_original>
